<compile_context>
chip_gen: v6e
topology: v6e:2x2x1
jax: 0.10.0
libtpu: 0.0.40
codegen_flags: <defaults>
</compile_context>

<pallas_src>
import functools

import jax
import jax.numpy as jnp
from jax.experimental import pallas as pl
from jax.experimental.pallas import tpu as pltpu


def _round_up(x, m):
    return ((x + m - 1) // m) * m


def _softmax_last(e):
    """Numerically-stable softmax over the last axis (f32 in, f32 out)."""
    m = jnp.max(e, axis=-1, keepdims=True)
    p = jnp.exp(e - m)
    inv = pl.reciprocal(jnp.sum(p, axis=-1, keepdims=True), approx=True)
    return p * inv


def _attn_kernel(x_ref, wq_ref, wk_ref, wv_ref, wo_ref, bo_ref, o_ref, *,
                 bb, seq, num_heads, head_dim, compute_dtype):
    """Grid = (batch // bb,). `bb` batch elements per invocation, all heads fused.

    x_ref  : (bb, seq, E)       tokens (f32)
    wq_ref : (E, E)             block-diagonal Q weight (1/sqrt(hd) folded in)
    wk_ref : (E, E)             block-diagonal K weight
    wv_ref : (E, E)             block-diagonal V weight
    wo_ref : (E, E_pad)         fc_out weight (transposed), zero-padded lane width
    bo_ref : (1, E_pad)         fc_out bias, zero-padded
    o_ref  : (bb, seq, E_pad)   lane-dense output slab (f32)
    """
    emb = num_heads * head_dim

    if bb == 1:
        xf = x_ref[0].astype(compute_dtype)                                # (seq, E)
    else:
        # seq % 8 == 0 is guaranteed by the wrapper -> free sublane merge.
        xf = x_ref[...].reshape(bb * seq, emb).astype(compute_dtype)       # (rows, E)

    # Lane-dense fused Q/K/V: one (rows, E) @ (E, E) MXU matmul per projection.
    q = jnp.dot(xf, wq_ref[...], preferred_element_type=jnp.float32)       # scaled Q
    k = jnp.dot(xf, wk_ref[...], preferred_element_type=jnp.float32)
    v = jnp.dot(xf, wv_ref[...], preferred_element_type=jnp.float32)

    if bb > 1:
        q = q.reshape(bb, seq, emb)
        k = k.reshape(bb, seq, emb)
        v = v.reshape(bb, seq, emb)

    # Per-head attention, unrolled inside the kernel (no per-head grid steps).
    head_outs = []
    for h in range(num_heads):
        lo = h * head_dim
        qh = q[..., lo:lo + head_dim].astype(compute_dtype)
        kh = k[..., lo:lo + head_dim].astype(compute_dtype)
        vh = v[..., lo:lo + head_dim].astype(compute_dtype)

        if bb == 1:
            e = jnp.einsum('qd,kd->qk', qh, kh,
                           preferred_element_type=jnp.float32)             # (seq, seq)
            attn = _softmax_last(e).astype(compute_dtype)
            head_outs.append(
                jnp.dot(attn, vh, preferred_element_type=jnp.float32))     # (seq, hd)
        else:
            e = jnp.einsum('bqd,bkd->bqk', qh, kh,
                           preferred_element_type=jnp.float32)             # (bb,seq,seq)
            attn = _softmax_last(e).astype(compute_dtype)
            head_outs.append(
                jnp.einsum('bqk,bkd->bqd', attn, vh,
                           preferred_element_type=jnp.float32))            # (bb,seq,hd)

    out_cat = jnp.concatenate(head_outs, axis=-1)                          # f32, (...,E)
    if bb > 1:
        out_cat = out_cat.reshape(bb * seq, emb)
    out_cat = out_cat.astype(compute_dtype)

    # Single K=E output projection + bias; one lane-dense store.
    proj = jnp.dot(out_cat, wo_ref[...], preferred_element_type=jnp.float32)
    proj = proj + bo_ref[...]                                              # (rows, E_pad)

    if bb == 1:
        o_ref[0] = proj.astype(o_ref.dtype)
    else:
        o_ref[...] = proj.reshape(bb, seq, -1).astype(o_ref.dtype)


def _pick_batch_block(batch, seq, emb, emb_pad):
    """Largest divisor of `batch` whose per-step footprint fits a safe VMEM budget."""
    if seq % 8 != 0:
        return 1                       # keep reshape-free fallback path
    # rough f32-equivalent per-batch-element footprint inside one grid step
    per_b = 4 * seq * (emb             # x tile
                       + 3 * emb       # q, k, v
                       + seq           # energy / probs for one head (transient)
                       + emb           # concatenated head outputs
                       + 2 * emb_pad)  # projection + output tile
    per_b *= 2                         # double-buffered tiles + layout slack
    budget = 8 * 1024 * 1024           # well under default scoped VMEM (16/32 MiB)
    max_bb = max(1, budget // max(per_b, 1))
    bb = 1
    for d in range(1, batch + 1):
        if batch % d == 0 and d <= max_bb:
            bb = d
    return bb


def transformer_self_attention(x, wq, wk, wv, wo, bo, *, num_heads,
                               compute_dtype=jnp.bfloat16):
    """x: (batch, num_classes, embedding_size) float32.

    wq, wk, wv: (head_dim, head_dim)  -- nn.Linear weights (y = x @ W.T), bias-free
    wo: (E, E), bo: (E,)              -- fc_out weight / bias
    Returns (batch, num_classes, E) float32.
    """
    batch, seq, emb = x.shape
    head_dim = emb // num_heads
    assert head_dim * num_heads == emb, "embedding_size must be divisible by num_heads"

    # --- weight prep (tiny, trace-time; NOT input/activation pre-scaling) ---------
    # Block-diagonal per-head linears so Q/K/V become one (rows,E)@(E,E) matmul each:
    # (x @ BD)[:, h*hd:(h+1)*hd] == x[:, h*hd:(h+1)*hd] @ w.T  for every head h.
    def block_diag(w):
        bd = jnp.zeros((emb, emb), dtype=jnp.float32)
        wt = w.T.astype(jnp.float32)
        for h in range(num_heads):
            lo = h * head_dim
            bd = bd.at[lo:lo + head_dim, lo:lo + head_dim].set(wt)
        return bd

    scale = 1.0 / (head_dim ** 0.5)
    wq_bd = (block_diag(wq) * scale).astype(compute_dtype)   # softmax scale folded in
    wk_bd = block_diag(wk).astype(compute_dtype)
    wv_bd = block_diag(wv).astype(compute_dtype)

    # fc_out weight (transposed) zero-padded on the output dim so the kernel store
    # is lane-dense (last dim a multiple of 128); padded columns produce zeros that
    # are sliced off below.
    emb_pad = _round_up(emb, 128)
    woT = wo.T.astype(jnp.float32)
    bo_f = bo.astype(jnp.float32)
    if emb_pad != emb:
        woT = jnp.pad(woT, ((0, 0), (0, emb_pad - emb)))
        bo_f = jnp.pad(bo_f, (0, emb_pad - emb))
    woT = woT.astype(compute_dtype)
    bo2 = bo_f.reshape(1, emb_pad)

    bb = _pick_batch_block(batch, seq, emb, emb_pad)

    kernel = functools.partial(_attn_kernel, bb=bb, seq=seq, num_heads=num_heads,
                               head_dim=head_dim, compute_dtype=compute_dtype)

    out = pl.pallas_call(
        kernel,
        out_shape=jax.ShapeDtypeStruct((batch, seq, emb_pad), jnp.float32),
        grid_spec=pltpu.PrefetchScalarGridSpec(
            num_scalar_prefetch=0,
            grid=(batch // bb,),
            in_specs=[
                # x passed as-is (no wrapper transpose); heads split in-kernel.
                pl.BlockSpec((bb, seq, emb), lambda n: (n, 0, 0)),
                # Weights: constant block index -> DMA'd once, resident in VMEM.
                pl.BlockSpec((emb, emb), lambda n: (0, 0)),
                pl.BlockSpec((emb, emb), lambda n: (0, 0)),
                pl.BlockSpec((emb, emb), lambda n: (0, 0)),
                pl.BlockSpec((emb, emb_pad), lambda n: (0, 0)),
                pl.BlockSpec((1, emb_pad), lambda n: (0, 0)),
            ],
            out_specs=pl.BlockSpec((bb, seq, emb_pad), lambda n: (n, 0, 0)),
        ),
        compiler_params=pltpu.CompilerParams(
            # batch axis is independent -> "parallel" (shards across v7x's 2 TCs).
            dimension_semantics=("parallel",)),
    )(x, wq_bd, wk_bd, wv_bd, woT, bo2)

    if emb_pad != emb:
        out = out[..., :emb]
    return out


def _reference(x, wq, wk, wv, wo, bo, *, num_heads):
    """Pure-JAX f32 reference mirroring the PyTorch forward exactly."""
    batch, seq, emb = x.shape
    hd = emb // num_heads
    B = x.reshape(batch, seq, num_heads, hd)
    values = B @ wv.T
    keys = B @ wk.T
    queries = B @ wq.T
    energy = jnp.einsum('nqhd,nkhd->nhqk', queries, keys) / (hd ** 0.5)
    attention = jax.nn.softmax(energy, axis=3)
    out = jnp.einsum('nhql,nlhd->nqhd', attention, values)
    out = out.reshape(batch, seq, emb)
    return out @ wo.T + bo


if __name__ == "__main__":
    # Small shapes: batch=2, num_classes=8, embedding_size=32, num_heads=4
    batch, seq, emb, num_heads = 2, 8, 32, 4
    head_dim = emb // num_heads

    key = jax.random.PRNGKey(0)
    kx, kq, kk, kv, ko, kb = jax.random.split(key, 6)

    x = jax.random.normal(kx, (batch, seq, emb), dtype=jnp.float32)

    # Deterministic synthetic parameters (no checkpoint).
    wq = jax.random.normal(kq, (head_dim, head_dim), dtype=jnp.float32) * 0.1
    wk = jax.random.normal(kk, (head_dim, head_dim), dtype=jnp.float32) * 0.1
    wv = jax.random.normal(kv, (head_dim, head_dim), dtype=jnp.float32) * 0.1
    wo = jax.random.normal(ko, (emb, emb), dtype=jnp.float32) * 0.1
    bo = jax.random.normal(kb, (emb,), dtype=jnp.float32) * 0.1

    ref = _reference(x, wq, wk, wv, wo, bo, num_heads=num_heads)

    # f32 MXU operands: tight check (only approx-reciprocal differs from reference).
    out_f32 = jax.block_until_ready(
        transformer_self_attention(x, wq, wk, wv, wo, bo, num_heads=num_heads,
                                   compute_dtype=jnp.float32))
    assert out_f32.shape == (batch, seq, emb)
    assert jnp.allclose(out_f32, ref, atol=5e-3, rtol=5e-3), "f32 path mismatch"

    # Default fast path: bf16 MXU operands with f32 accumulation (v6e/v7x recipe);
    # tolerance reflects bf16 operand rounding, real bugs would be O(1) off.
    out_bf16 = jax.block_until_ready(
        transformer_self_attention(x, wq, wk, wv, wo, bo, num_heads=num_heads,
                                   compute_dtype=jnp.bfloat16))
    assert out_bf16.shape == (batch, seq, emb)
    assert jnp.allclose(out_bf16, ref, atol=2e-2, rtol=2e-2), "bf16 path mismatch"

    print("KERNEL_OK")
</pallas_src>

<mosaic_0001>
module attributes {stable_mosaic.version = 11 : i64} {
  func.func @_attn_kernel(%arg0: i32, %arg1: memref<2x8x32xf32, #tpu.memory_space<vmem>>, %arg2: memref<32x32xf32, #tpu.memory_space<vmem>>, %arg3: memref<32x32xf32, #tpu.memory_space<vmem>>, %arg4: memref<32x32xf32, #tpu.memory_space<vmem>>, %arg5: memref<32x128xf32, #tpu.memory_space<vmem>>, %arg6: memref<1x128xf32, #tpu.memory_space<vmem>>, %arg7: memref<2x8x128xf32, #tpu.memory_space<vmem>>) attributes {dimension_semantics = [#tpu.dimension_semantics<parallel>], iteration_bounds = array<i64: 1>, scalar_prefetch = 0 : i64, scratch_operands = 0 : i64, tpu.core_type = #tpu.core_type<tc>, window_params = [{transform_indices = @transform_0, window_bounds = array<i64: 2, 8, 32>}, {pipeline_mode = #tpu.pipeline_mode<synchronous>, transform_indices = @transform_1, window_bounds = array<i64: 32, 32>}, {pipeline_mode = #tpu.pipeline_mode<synchronous>, transform_indices = @transform_2, window_bounds = array<i64: 32, 32>}, {pipeline_mode = #tpu.pipeline_mode<synchronous>, transform_indices = @transform_3, window_bounds = array<i64: 32, 32>}, {pipeline_mode = #tpu.pipeline_mode<synchronous>, transform_indices = @transform_4, window_bounds = array<i64: 32, 128>}, {pipeline_mode = #tpu.pipeline_mode<synchronous>, transform_indices = @transform_5, window_bounds = array<i64: 1, 128>}, {transform_indices = @transform_6, window_bounds = array<i64: 2, 8, 128>}]} {
    %c0 = arith.constant 0 : index
    %c0_0 = arith.constant 0 : index
    %c0_1 = arith.constant 0 : index
    %0 = vector.load %arg1[%c0, %c0_0, %c0_1] : memref<2x8x32xf32, #tpu.memory_space<vmem>>, vector<2x8x32xf32>
    %1 = vector.shape_cast %0 : vector<2x8x32xf32> to vector<16x32xf32>
    %c0_2 = arith.constant 0 : index
    %c0_3 = arith.constant 0 : index
    %2 = vector.load %arg2[%c0_2, %c0_3] : memref<32x32xf32, #tpu.memory_space<vmem>>, vector<32x32xf32>
    %cst = arith.constant dense<0.000000e+00> : vector<16x32xf32>
    %3 = tpu.matmul %1, %2, %cst {dimension_numbers = #tpu.dot_dimension_numbers<[1], [0], [0], [1], [0, 0, 1, 1], [], []>} : vector<16x32xf32>, vector<32x32xf32>, vector<16x32xf32> -> vector<16x32xf32>
    %c0_4 = arith.constant 0 : index
    %c0_5 = arith.constant 0 : index
    %4 = vector.load %arg3[%c0_4, %c0_5] : memref<32x32xf32, #tpu.memory_space<vmem>>, vector<32x32xf32>
    %cst_6 = arith.constant dense<0.000000e+00> : vector<16x32xf32>
    %5 = tpu.matmul %1, %4, %cst_6 {dimension_numbers = #tpu.dot_dimension_numbers<[1], [0], [0], [1], [0, 0, 1, 1], [], []>} : vector<16x32xf32>, vector<32x32xf32>, vector<16x32xf32> -> vector<16x32xf32>
    %c0_7 = arith.constant 0 : index
    %c0_8 = arith.constant 0 : index
    %6 = vector.load %arg4[%c0_7, %c0_8] : memref<32x32xf32, #tpu.memory_space<vmem>>, vector<32x32xf32>
    %cst_9 = arith.constant dense<0.000000e+00> : vector<16x32xf32>
    %7 = tpu.matmul %1, %6, %cst_9 {dimension_numbers = #tpu.dot_dimension_numbers<[1], [0], [0], [1], [0, 0, 1, 1], [], []>} : vector<16x32xf32>, vector<32x32xf32>, vector<16x32xf32> -> vector<16x32xf32>
    %8 = vector.shape_cast %3 : vector<16x32xf32> to vector<2x8x32xf32>
    %9 = vector.shape_cast %5 : vector<16x32xf32> to vector<2x8x32xf32>
    %10 = vector.shape_cast %7 : vector<16x32xf32> to vector<2x8x32xf32>
    %11 = vector.extract_strided_slice %8 {offsets = [0, 0, 0], sizes = [2, 8, 8], strides = [1, 1, 1]} : vector<2x8x32xf32> to vector<2x8x8xf32>
    %12 = vector.extract_strided_slice %9 {offsets = [0, 0, 0], sizes = [2, 8, 8], strides = [1, 1, 1]} : vector<2x8x32xf32> to vector<2x8x8xf32>
    %13 = vector.extract_strided_slice %10 {offsets = [0, 0, 0], sizes = [2, 8, 8], strides = [1, 1, 1]} : vector<2x8x32xf32> to vector<2x8x8xf32>
    "tpu.trace_start"() <{level = 10 : i32, message = "bqd,bkd->bqk"}> : () -> ()
    %cst_10 = arith.constant dense<0.000000e+00> : vector<2x8x8xf32>
    %14 = tpu.matmul %11, %12, %cst_10 {dimension_numbers = #tpu.dot_dimension_numbers<[2], [2], [1], [1], [0, 0, 0, 1, 1, 1], [0], [0]>} : vector<2x8x8xf32>, vector<2x8x8xf32>, vector<2x8x8xf32> -> vector<2x8x8xf32>
    "tpu.trace_stop"() : () -> ()
    %cst_11 = arith.constant dense<0xFF800000> : vector<2x8xf32>
    %15 = vector.multi_reduction <maximumf>, %14, %cst_11 [2] : vector<2x8x8xf32> to vector<2x8xf32>
    %16 = vector.shape_cast %15 : vector<2x8xf32> to vector<2x8x1xf32>
    %17 = vector.broadcast %16 : vector<2x8x1xf32> to vector<2x8x8xf32>
    %18 = arith.subf %14, %17 : vector<2x8x8xf32>
    %19 = math.exp %18 : vector<2x8x8xf32>
    %cst_12 = arith.constant dense<0.000000e+00> : vector<2x8xf32>
    %20 = vector.multi_reduction <add>, %19, %cst_12 [2] : vector<2x8x8xf32> to vector<2x8xf32>
    %21 = vector.shape_cast %20 : vector<2x8xf32> to vector<2x8x1xf32>
    %22 = tpu.reciprocal %21 {approx = true} : vector<2x8x1xf32> -> vector<2x8x1xf32>
    %23 = vector.broadcast %22 : vector<2x8x1xf32> to vector<2x8x8xf32>
    %24 = arith.mulf %19, %23 : vector<2x8x8xf32>
    "tpu.trace_start"() <{level = 10 : i32, message = "bqk,bkd->bqd"}> : () -> ()
    %cst_13 = arith.constant dense<0.000000e+00> : vector<2x8x8xf32>
    %25 = tpu.matmul %24, %13, %cst_13 {dimension_numbers = #tpu.dot_dimension_numbers<[2], [1], [1], [2], [0, 0, 0, 1, 1, 2], [0], [0]>} : vector<2x8x8xf32>, vector<2x8x8xf32>, vector<2x8x8xf32> -> vector<2x8x8xf32>
    "tpu.trace_stop"() : () -> ()
    %26 = vector.extract_strided_slice %8 {offsets = [0, 0, 8], sizes = [2, 8, 8], strides = [1, 1, 1]} : vector<2x8x32xf32> to vector<2x8x8xf32>
    %27 = vector.extract_strided_slice %9 {offsets = [0, 0, 8], sizes = [2, 8, 8], strides = [1, 1, 1]} : vector<2x8x32xf32> to vector<2x8x8xf32>
    %28 = vector.extract_strided_slice %10 {offsets = [0, 0, 8], sizes = [2, 8, 8], strides = [1, 1, 1]} : vector<2x8x32xf32> to vector<2x8x8xf32>
    "tpu.trace_start"() <{level = 10 : i32, message = "bqd,bkd->bqk"}> : () -> ()
    %cst_14 = arith.constant dense<0.000000e+00> : vector<2x8x8xf32>
    %29 = tpu.matmul %26, %27, %cst_14 {dimension_numbers = #tpu.dot_dimension_numbers<[2], [2], [1], [1], [0, 0, 0, 1, 1, 1], [0], [0]>} : vector<2x8x8xf32>, vector<2x8x8xf32>, vector<2x8x8xf32> -> vector<2x8x8xf32>
    "tpu.trace_stop"() : () -> ()
    %cst_15 = arith.constant dense<0xFF800000> : vector<2x8xf32>
    %30 = vector.multi_reduction <maximumf>, %29, %cst_15 [2] : vector<2x8x8xf32> to vector<2x8xf32>
    %31 = vector.shape_cast %30 : vector<2x8xf32> to vector<2x8x1xf32>
    %32 = vector.broadcast %31 : vector<2x8x1xf32> to vector<2x8x8xf32>
    %33 = arith.subf %29, %32 : vector<2x8x8xf32>
    %34 = math.exp %33 : vector<2x8x8xf32>
    %cst_16 = arith.constant dense<0.000000e+00> : vector<2x8xf32>
    %35 = vector.multi_reduction <add>, %34, %cst_16 [2] : vector<2x8x8xf32> to vector<2x8xf32>
    %36 = vector.shape_cast %35 : vector<2x8xf32> to vector<2x8x1xf32>
    %37 = tpu.reciprocal %36 {approx = true} : vector<2x8x1xf32> -> vector<2x8x1xf32>
    %38 = vector.broadcast %37 : vector<2x8x1xf32> to vector<2x8x8xf32>
    %39 = arith.mulf %34, %38 : vector<2x8x8xf32>
    "tpu.trace_start"() <{level = 10 : i32, message = "bqk,bkd->bqd"}> : () -> ()
    %cst_17 = arith.constant dense<0.000000e+00> : vector<2x8x8xf32>
    %40 = tpu.matmul %39, %28, %cst_17 {dimension_numbers = #tpu.dot_dimension_numbers<[2], [1], [1], [2], [0, 0, 0, 1, 1, 2], [0], [0]>} : vector<2x8x8xf32>, vector<2x8x8xf32>, vector<2x8x8xf32> -> vector<2x8x8xf32>
    "tpu.trace_stop"() : () -> ()
    %41 = vector.extract_strided_slice %8 {offsets = [0, 0, 16], sizes = [2, 8, 8], strides = [1, 1, 1]} : vector<2x8x32xf32> to vector<2x8x8xf32>
    %42 = vector.extract_strided_slice %9 {offsets = [0, 0, 16], sizes = [2, 8, 8], strides = [1, 1, 1]} : vector<2x8x32xf32> to vector<2x8x8xf32>
    %43 = vector.extract_strided_slice %10 {offsets = [0, 0, 16], sizes = [2, 8, 8], strides = [1, 1, 1]} : vector<2x8x32xf32> to vector<2x8x8xf32>
    "tpu.trace_start"() <{level = 10 : i32, message = "bqd,bkd->bqk"}> : () -> ()
    %cst_18 = arith.constant dense<0.000000e+00> : vector<2x8x8xf32>
    %44 = tpu.matmul %41, %42, %cst_18 {dimension_numbers = #tpu.dot_dimension_numbers<[2], [2], [1], [1], [0, 0, 0, 1, 1, 1], [0], [0]>} : vector<2x8x8xf32>, vector<2x8x8xf32>, vector<2x8x8xf32> -> vector<2x8x8xf32>
    "tpu.trace_stop"() : () -> ()
    %cst_19 = arith.constant dense<0xFF800000> : vector<2x8xf32>
    %45 = vector.multi_reduction <maximumf>, %44, %cst_19 [2] : vector<2x8x8xf32> to vector<2x8xf32>
    %46 = vector.shape_cast %45 : vector<2x8xf32> to vector<2x8x1xf32>
    %47 = vector.broadcast %46 : vector<2x8x1xf32> to vector<2x8x8xf32>
    %48 = arith.subf %44, %47 : vector<2x8x8xf32>
    %49 = math.exp %48 : vector<2x8x8xf32>
    %cst_20 = arith.constant dense<0.000000e+00> : vector<2x8xf32>
    %50 = vector.multi_reduction <add>, %49, %cst_20 [2] : vector<2x8x8xf32> to vector<2x8xf32>
    %51 = vector.shape_cast %50 : vector<2x8xf32> to vector<2x8x1xf32>
    %52 = tpu.reciprocal %51 {approx = true} : vector<2x8x1xf32> -> vector<2x8x1xf32>
    %53 = vector.broadcast %52 : vector<2x8x1xf32> to vector<2x8x8xf32>
    %54 = arith.mulf %49, %53 : vector<2x8x8xf32>
    "tpu.trace_start"() <{level = 10 : i32, message = "bqk,bkd->bqd"}> : () -> ()
    %cst_21 = arith.constant dense<0.000000e+00> : vector<2x8x8xf32>
    %55 = tpu.matmul %54, %43, %cst_21 {dimension_numbers = #tpu.dot_dimension_numbers<[2], [1], [1], [2], [0, 0, 0, 1, 1, 2], [0], [0]>} : vector<2x8x8xf32>, vector<2x8x8xf32>, vector<2x8x8xf32> -> vector<2x8x8xf32>
    "tpu.trace_stop"() : () -> ()
    %56 = vector.extract_strided_slice %8 {offsets = [0, 0, 24], sizes = [2, 8, 8], strides = [1, 1, 1]} : vector<2x8x32xf32> to vector<2x8x8xf32>
    %57 = vector.extract_strided_slice %9 {offsets = [0, 0, 24], sizes = [2, 8, 8], strides = [1, 1, 1]} : vector<2x8x32xf32> to vector<2x8x8xf32>
    %58 = vector.extract_strided_slice %10 {offsets = [0, 0, 24], sizes = [2, 8, 8], strides = [1, 1, 1]} : vector<2x8x32xf32> to vector<2x8x8xf32>
    "tpu.trace_start"() <{level = 10 : i32, message = "bqd,bkd->bqk"}> : () -> ()
    %cst_22 = arith.constant dense<0.000000e+00> : vector<2x8x8xf32>
    %59 = tpu.matmul %56, %57, %cst_22 {dimension_numbers = #tpu.dot_dimension_numbers<[2], [2], [1], [1], [0, 0, 0, 1, 1, 1], [0], [0]>} : vector<2x8x8xf32>, vector<2x8x8xf32>, vector<2x8x8xf32> -> vector<2x8x8xf32>
    "tpu.trace_stop"() : () -> ()
    %cst_23 = arith.constant dense<0xFF800000> : vector<2x8xf32>
    %60 = vector.multi_reduction <maximumf>, %59, %cst_23 [2] : vector<2x8x8xf32> to vector<2x8xf32>
    %61 = vector.shape_cast %60 : vector<2x8xf32> to vector<2x8x1xf32>
    %62 = vector.broadcast %61 : vector<2x8x1xf32> to vector<2x8x8xf32>
    %63 = arith.subf %59, %62 : vector<2x8x8xf32>
    %64 = math.exp %63 : vector<2x8x8xf32>
    %cst_24 = arith.constant dense<0.000000e+00> : vector<2x8xf32>
    %65 = vector.multi_reduction <add>, %64, %cst_24 [2] : vector<2x8x8xf32> to vector<2x8xf32>
    %66 = vector.shape_cast %65 : vector<2x8xf32> to vector<2x8x1xf32>
    %67 = tpu.reciprocal %66 {approx = true} : vector<2x8x1xf32> -> vector<2x8x1xf32>
    %68 = vector.broadcast %67 : vector<2x8x1xf32> to vector<2x8x8xf32>
    %69 = arith.mulf %64, %68 : vector<2x8x8xf32>
    "tpu.trace_start"() <{level = 10 : i32, message = "bqk,bkd->bqd"}> : () -> ()
    %cst_25 = arith.constant dense<0.000000e+00> : vector<2x8x8xf32>
    %70 = tpu.matmul %69, %58, %cst_25 {dimension_numbers = #tpu.dot_dimension_numbers<[2], [1], [1], [2], [0, 0, 0, 1, 1, 2], [0], [0]>} : vector<2x8x8xf32>, vector<2x8x8xf32>, vector<2x8x8xf32> -> vector<2x8x8xf32>
    "tpu.trace_stop"() : () -> ()
    %71 = tpu.concatenate %25, %40, %55, %70 in 2 : vector<2x8x8xf32>, vector<2x8x8xf32>, vector<2x8x8xf32>, vector<2x8x8xf32> -> vector<2x8x32xf32>
    %72 = vector.shape_cast %71 : vector<2x8x32xf32> to vector<16x32xf32>
    %c0_26 = arith.constant 0 : index
    %c0_27 = arith.constant 0 : index
    %73 = vector.load %arg5[%c0_26, %c0_27] : memref<32x128xf32, #tpu.memory_space<vmem>>, vector<32x128xf32>
    %cst_28 = arith.constant dense<0.000000e+00> : vector<16x128xf32>
    %74 = tpu.matmul %72, %73, %cst_28 {dimension_numbers = #tpu.dot_dimension_numbers<[1], [0], [0], [1], [0, 0, 1, 1], [], []>} : vector<16x32xf32>, vector<32x128xf32>, vector<16x128xf32> -> vector<16x128xf32>
    %c0_29 = arith.constant 0 : index
    %c0_30 = arith.constant 0 : index
    %75 = vector.load %arg6[%c0_29, %c0_30] : memref<1x128xf32, #tpu.memory_space<vmem>>, vector<1x128xf32>
    %76 = vector.broadcast %75 : vector<1x128xf32> to vector<16x128xf32>
    %77 = arith.addf %74, %76 : vector<16x128xf32>
    %78 = vector.shape_cast %77 : vector<16x128xf32> to vector<2x8x128xf32>
    %c0_31 = arith.constant 0 : index
    %c0_32 = arith.constant 0 : index
    %c0_33 = arith.constant 0 : index
    %79 = vector.load %arg7[%c0_31, %c0_32, %c0_33] : memref<2x8x128xf32, #tpu.memory_space<vmem>>, vector<2x8x128xf32>
    tpu.vector_store %arg7[%c0_31, %c0_32, %c0_33], %78 {strides = array<i32>} : memref<2x8x128xf32, #tpu.memory_space<vmem>>, vector<2x8x128xf32>,
    return
  }
  func.func @transform_0(%arg0: i32) -> (i32, i32, i32) {
    %c0_i32 = arith.constant 0 : i32
    %c0_i32_0 = arith.constant 0 : i32
    %c0_i32_1 = arith.constant 0 : i32
    return %arg0, %c0_i32, %c0_i32_0 : i32, i32, i32
  }
  func.func @transform_1(%arg0: i32) -> (i32, i32) {
    %c0_i32 = arith.constant 0 : i32
    %c0_i32_0 = arith.constant 0 : i32
    %c0_i32_1 = arith.constant 0 : i32
    return %c0_i32, %c0_i32_0 : i32, i32
  }
  func.func @transform_2(%arg0: i32) -> (i32, i32) {
    %c0_i32 = arith.constant 0 : i32
    %c0_i32_0 = arith.constant 0 : i32
    %c0_i32_1 = arith.constant 0 : i32
    return %c0_i32, %c0_i32_0 : i32, i32
  }
  func.func @transform_3(%arg0: i32) -> (i32, i32) {
    %c0_i32 = arith.constant 0 : i32
    %c0_i32_0 = arith.constant 0 : i32
    %c0_i32_1 = arith.constant 0 : i32
    return %c0_i32, %c0_i32_0 : i32, i32
  }
  func.func @transform_4(%arg0: i32) -> (i32, i32) {
    %c0_i32 = arith.constant 0 : i32
    %c0_i32_0 = arith.constant 0 : i32
    %c0_i32_1 = arith.constant 0 : i32
    return %c0_i32, %c0_i32_0 : i32, i32
  }
  func.func @transform_5(%arg0: i32) -> (i32, i32) {
    %c0_i32 = arith.constant 0 : i32
    %c0_i32_0 = arith.constant 0 : i32
    %c0_i32_1 = arith.constant 0 : i32
    return %c0_i32, %c0_i32_0 : i32, i32
  }
  func.func @transform_6(%arg0: i32) -> (i32, i32, i32) {
    %c0_i32 = arith.constant 0 : i32
    %c0_i32_0 = arith.constant 0 : i32
    %c0_i32_1 = arith.constant 0 : i32
    return %arg0, %c0_i32, %c0_i32_0 : i32, i32, i32
  }
}

</mosaic_0001>

<llo_original>
// kernel: tpu_custom_call.1
$region0: #{tpu_custom_call.1}
  #allocation0 [shape = 'u32[]', space=smem, size = 0x4, offset = 0x4, fixed_abs, tag = 'smem constant byte address 0x4 - core index']
  #allocation1 [shape = 'u32[144,128]{1,0:T(1,128)}', space=vmem, size = 0x12000, scoped, tag = 'internal scratch']
  %s0 = inlined_call_operand.hbm [shape: f32[2,8,32], index: 0, kind: input, shape index: {}]
  %s1 = inlined_call_operand.hbm [shape: f32[32,32], index: 1, kind: input, shape index: {}]
  %s2 = inlined_call_operand.hbm [shape: f32[32,32], index: 2, kind: input, shape index: {}]
  %s3 = inlined_call_operand.hbm [shape: f32[32,32], index: 3, kind: input, shape index: {}]
  %s4 = inlined_call_operand.hbm [shape: f32[32,128], index: 4, kind: input, shape index: {}]
  %s5 = inlined_call_operand.vmem [shape: f32[1,128], index: 5, kind: input, shape index: {}]
  %s6 = inlined_call_operand.hbm [shape: f32[2,8,128], index: 6, kind: output, shape index: {}]
  %s7 = sld [smem:[#allocation0]]
  $region54: #{tpu_custom_call.1} parent=0
    _
  %s9 = ssub.s32 1, %s7
  %s10 = scalar_select 0, %s9, %s7
  $region1: #{tpu_custom_call.1} parent=0
    #allocation2 [shape = 'u8[8192]{0}', space=vmem, size = 0x2000, scoped, tag = 'input window, operand 0, single buffered']
    #allocation3 [shape = 's32[1]{0}', space=sflag, size = 0x4, scoped, tag = 'scoped memory for tpu_custom_call.1']
    #allocation4 [shape = 's32[1]{0}', space=sflag, size = 0x4, scoped, tag = 'scoped memory for tpu_custom_call.1']
    #allocation5 [shape = 'u8[16384]{0}', space=vmem, size = 0x4000, scoped, tag = 'input window, operand 1, single buffered']
    #allocation6 [shape = 's32[1]{0}', space=sflag, size = 0x4, scoped, tag = 'scoped memory for tpu_custom_call.1']
    #allocation7 [shape = 'u8[16384]{0}', space=vmem, size = 0x4000, scoped, tag = 'input window, operand 2, single buffered']
    #allocation8 [shape = 'u8[16384]{0}', space=vmem, size = 0x4000, scoped, tag = 'input window, operand 3, single buffered']
    #allocation9 [shape = 's32[1]{0}', space=sflag, size = 0x4, scoped, tag = 'scoped memory for tpu_custom_call.1']
    #allocation10 [shape = 'u8[16384]{0}', space=vmem, size = 0x4000, scoped, tag = 'input window, operand 4, single buffered']
    #allocation11 [shape = 'u8[8192]{0}', space=vmem, size = 0x2000, scoped, tag = 'output window, operand 0, single buffered']
    %11 = vsyncpa [#allocation3], 0
    %12 = vsyncpa [#allocation6], 0
    %13 = vsyncpa [#allocation9], 0
    %14 = vsyncpa [#allocation4], 0
    // Predicated region
    $region2: #{tpu_custom_call.1} parent=1 // pred_check
      _
    $region3: #{tpu_custom_call.1} parent=1 // pred_check_branch
      %16 = sbr.rel (0) target = $region5
    $region4: #{tpu_custom_call.1} parent=1 // pred_region
      %s18 = ssub.s32 256, 256
      %19 = vsyncadd [#allocation3], %s18
      %s20 = sshll.u32 [#allocation2], 4
      %s21 = int_to_ptr.vmem [resolvable:$true] %s20
      %26 = dma.hbm_to_vmem [thread:$0]  %s0, 256, %s21, [#allocation3], 128, 128, 8
    $region5: #{tpu_custom_call.1} parent=1 // pred_fallthru
      _
    // Predicated region
    $region6: #{tpu_custom_call.1} parent=1 // pred_check
      _
    $region7: #{tpu_custom_call.1} parent=1 // pred_check_branch
      %28 = sbr.rel (0) target = $region9
    $region8: #{tpu_custom_call.1} parent=1 // pred_region
      %s30 = ssub.s32 512, 512
      %31 = vsyncadd [#allocation6], %s30
      %s32 = sshll.u32 [#allocation5], 4
      %s33 = int_to_ptr.vmem [resolvable:$true] %s32
      %38 = dma.hbm_to_vmem [thread:$0]  %s1, 512, %s33, [#allocation6], 128, 128, 8
    $region9: #{tpu_custom_call.1} parent=1 // pred_fallthru
      _
    // Predicated region
    $region10: #{tpu_custom_call.1} parent=1 // pred_check
      _
    $region11: #{tpu_custom_call.1} parent=1 // pred_check_branch
      %40 = sbr.rel (0) target = $region13
    $region12: #{tpu_custom_call.1} parent=1 // pred_region
      %s42 = ssub.s32 512, 512
      %43 = vsyncadd [#allocation6], %s42
      %s44 = sshll.u32 [#allocation7], 4
      %s45 = int_to_ptr.vmem [resolvable:$true] %s44
      %50 = dma.hbm_to_vmem [thread:$0]  %s2, 512, %s45, [#allocation6], 128, 128, 8
    $region13: #{tpu_custom_call.1} parent=1 // pred_fallthru
      _
    // Predicated region
    $region14: #{tpu_custom_call.1} parent=1 // pred_check
      _
    $region15: #{tpu_custom_call.1} parent=1 // pred_check_branch
      %52 = sbr.rel (0) target = $region17
    $region16: #{tpu_custom_call.1} parent=1 // pred_region
      %s54 = ssub.s32 512, 512
      %55 = vsyncadd [#allocation9], %s54
      %s56 = sshll.u32 [#allocation8], 4
      %s57 = int_to_ptr.vmem [resolvable:$true] %s56
      %62 = dma.hbm_to_vmem [thread:$0]  %s3, 512, %s57, [#allocation9], 128, 128, 8
    $region17: #{tpu_custom_call.1} parent=1 // pred_fallthru
      _
    // Predicated region
    $region18: #{tpu_custom_call.1} parent=1 // pred_check
      _
    $region19: #{tpu_custom_call.1} parent=1 // pred_check_branch
      %64 = sbr.rel (0) target = $region21
    $region20: #{tpu_custom_call.1} parent=1 // pred_region
      %s66 = ssub.s32 512, 512
      %67 = vsyncadd [#allocation9], %s66
      %s68 = sshll.u32 [#allocation10], 4
      %s69 = int_to_ptr.vmem [resolvable:$true] %s68
      %74 = dma.hbm_to_vmem [thread:$0]  %s4, 512, %s69, [#allocation9], 128, 128, 8
    $region21: #{tpu_custom_call.1} parent=1 // pred_fallthru
      _
    // Predicated region
    $region22: #{tpu_custom_call.1} parent=1 // pred_check
      _
    $region23: #{tpu_custom_call.1} parent=1 // pred_check_branch
      %76 = sbr.rel (0) target = $region25
    $region24: #{tpu_custom_call.1} parent=1 // pred_region
      _
    $region25: #{tpu_custom_call.1} parent=1 // pred_fallthru
      _
    // Predicated region
    $region26: #{tpu_custom_call.1} parent=1 // pred_check
      _
    $region27: #{tpu_custom_call.1} parent=1 // pred_check_branch
      %78 = sbr.rel (0) target = $region29
    $region28: #{tpu_custom_call.1} parent=1 // pred_region
      %79 = dma.done [#allocation3], 256
    $region29: #{tpu_custom_call.1} parent=1 // pred_fallthru
      _
    // Predicated region
    $region30: #{tpu_custom_call.1} parent=1 // pred_check
      _
    $region31: #{tpu_custom_call.1} parent=1 // pred_check_branch
      %81 = sbr.rel (0) target = $region33
    $region32: #{tpu_custom_call.1} parent=1 // pred_region
      %82 = dma.done [#allocation6], 512
    $region33: #{tpu_custom_call.1} parent=1 // pred_fallthru
      _
    // Predicated region
    $region34: #{tpu_custom_call.1} parent=1 // pred_check
      _
    $region35: #{tpu_custom_call.1} parent=1 // pred_check_branch
      %84 = sbr.rel (0) target = $region37
    $region36: #{tpu_custom_call.1} parent=1 // pred_region
      %85 = dma.done [#allocation6], 512
    $region37: #{tpu_custom_call.1} parent=1 // pred_fallthru
      _
    // Predicated region
    $region38: #{tpu_custom_call.1} parent=1 // pred_check
      _
    $region39: #{tpu_custom_call.1} parent=1 // pred_check_branch
      %87 = sbr.rel (0) target = $region41
    $region40: #{tpu_custom_call.1} parent=1 // pred_region
      %88 = dma.done [#allocation9], 512
    $region41: #{tpu_custom_call.1} parent=1 // pred_fallthru
      _
    // Predicated region
    $region42: #{tpu_custom_call.1} parent=1 // pred_check
      _
    $region43: #{tpu_custom_call.1} parent=1 // pred_check_branch
      %90 = sbr.rel (0) target = $region45
    $region44: #{tpu_custom_call.1} parent=1 // pred_region
      %91 = dma.done [#allocation9], 512
    $region45: #{tpu_custom_call.1} parent=1 // pred_fallthru
      _
    %v92 = vld [vmem:[#allocation2] sm:$0xff]
    %v93 = vld [vmem:[#allocation2 + $0x8] sm:$0xff]
    %v94 = vld [vmem:[#allocation5] sm:$0xff]
    %v95 = vld [vmem:[#allocation5 + $0x8] sm:$0xff]
    %v96 = vld [vmem:[#allocation5 + $0x10] sm:$0xff]
    %v97 = vld [vmem:[#allocation5 + $0x18] sm:$0xff]
    %vm98 = vcmask 261120
    %v100 = vsel %vm98, %v92, 0
    %v103 = vsel %vm98, %v93, 0
    %105 = vmatprep.subr.mxu0 0.0
    %106 = vmatpush1.msra.mxu0 0.0
    %107 = vmatprep.subr.mxu0 0.0
    %108 = vmatpush1.msra.mxu0 0.0
    %109 = vmatprep.subr.mxu0 0.0
    %110 = vmatpush1.msra.mxu0 0.0
    %111 = vmatprep.subr.mxu0 0.0
    %112 = vmatpush1.msra.mxu0 0.0
    %113 = vmatprep.subr.mxu0 0.0
    %114 = vmatpush1.msra.mxu0 0.0
    %115 = vmatprep.subr.mxu0 0.0
    %116 = vmatpush1.msra.mxu0 0.0
    %117 = vmatprep.subr.mxu0 0.0
    %118 = vmatpush1.msra.mxu0 0.0
    %119 = vmatprep.subr.mxu0 0.0
    %120 = vmatpush1.msra.mxu0 0.0
    %121 = vmatprep.subr.mxu0 0.0
    %122 = vmatpush1.msra.mxu0 0.0
    %123 = vmatprep.subr.mxu0 0.0
    %124 = vmatpush1.msra.mxu0 0.0
    %125 = vmatprep.subr.mxu0 0.0
    %126 = vmatpush1.msra.mxu0 0.0
    %127 = vmatprep.subr.mxu0 0.0
    %128 = vmatpush1.msra.mxu0 0.0
    %129 = vmatprep.subr.mxu0 0.0
    %130 = vmatpush1.msra.mxu0 %v97
    %131 = vmatprep.subr.mxu0 0.0
    %132 = vmatpush1.msra.mxu0 %v96
    %133 = vmatprep.subr.mxu0 0.0
    %134 = vmatpush1.msra.mxu0 %v95
    %135 = vmatprep.subr.mxu0 0.0
    %136 = vmatpush1.msra.mxu0 %v94
    %137 = vmatprep.subr.mxu0 0.0
    %138 = vmatpush2.msra.mxu0 0.0
    %139 = vmatprep.subr.mxu0 0.0
    %140 = vmatpush2.msra.mxu0 0.0
    %141 = vmatprep.subr.mxu0 0.0
    %142 = vmatpush2.msra.mxu0 0.0
    %143 = vmatprep.subr.mxu0 0.0
    %144 = vmatpush2.msra.mxu0 0.0
    %145 = vmatprep.subr.mxu0 0.0
    %146 = vmatpush2.msra.mxu0 0.0
    %147 = vmatprep.subr.mxu0 0.0
    %148 = vmatpush2.msra.mxu0 0.0
    %149 = vmatprep.subr.mxu0 0.0
    %150 = vmatpush2.msra.mxu0 0.0
    %151 = vmatprep.subr.mxu0 0.0
    %152 = vmatpush2.msra.mxu0 0.0
    %153 = vmatprep.subr.mxu0 0.0
    %154 = vmatpush2.msra.mxu0 0.0
    %155 = vmatprep.subr.mxu0 0.0
    %156 = vmatpush2.msra.mxu0 0.0
    %157 = vmatprep.subr.mxu0 0.0
    %158 = vmatpush2.msra.mxu0 0.0
    %159 = vmatprep.subr.mxu0 0.0
    %160 = vmatpush2.msra.mxu0 0.0
    %161 = vmatprep.subr.mxu0 0.0
    %162 = vmatpush2.msra.mxu0 0.0
    %163 = vmatprep.subr.mxu0 0.0
    %164 = vmatpush2.msra.mxu0 0.0
    %165 = vmatprep.subr.mxu0 0.0
    %166 = vmatpush2.msra.mxu0 0.0
    %167 = vmatprep.subr.mxu0 0.0
    %168 = vmatpush2.msra.mxu0 0.0
    %169 = vmatprep.mubr.f32.mxu0 0.0
    %170 = vmatmul.mubr.f32.gmra.mxu0 %v100
    %v171 = vpop.f32.mrf.mxu0
    %v172 = vadd.f32 0.0, %v171
    %v173 = vpop.f32.mrf.mxu0
    %174 = vmatprep.mubr.f32.mxu0 0.0
    %175 = vmatmul.mubr.f32.gmra.mxu0 %v103
    %v176 = vpop.f32.mrf.mxu0
    %v177 = vadd.f32 0.0, %v176
    %v178 = vpop.f32.mrf.mxu0
    %179 = vdwg.mxu0
    %v180 = vld [vmem:[#allocation7] sm:$0xff]
    %v181 = vld [vmem:[#allocation7 + $0x8] sm:$0xff]
    %v182 = vld [vmem:[#allocation7 + $0x10] sm:$0xff]
    %v183 = vld [vmem:[#allocation7 + $0x18] sm:$0xff]
    %184 = vmatprep.subr.mxu0 0.0
    %185 = vmatpush1.msra.mxu0 0.0
    %186 = vmatprep.subr.mxu0 0.0
    %187 = vmatpush1.msra.mxu0 0.0
    %188 = vmatprep.subr.mxu0 0.0
    %189 = vmatpush1.msra.mxu0 0.0
    %190 = vmatprep.subr.mxu0 0.0
    %191 = vmatpush1.msra.mxu0 0.0
    %192 = vmatprep.subr.mxu0 0.0
    %193 = vmatpush1.msra.mxu0 0.0
    %194 = vmatprep.subr.mxu0 0.0
    %195 = vmatpush1.msra.mxu0 0.0
    %196 = vmatprep.subr.mxu0 0.0
    %197 = vmatpush1.msra.mxu0 0.0
    %198 = vmatprep.subr.mxu0 0.0
    %199 = vmatpush1.msra.mxu0 0.0
    %200 = vmatprep.subr.mxu0 0.0
    %201 = vmatpush1.msra.mxu0 0.0
    %202 = vmatprep.subr.mxu0 0.0
    %203 = vmatpush1.msra.mxu0 0.0
    %204 = vmatprep.subr.mxu0 0.0
    %205 = vmatpush1.msra.mxu0 0.0
    %206 = vmatprep.subr.mxu0 0.0
    %207 = vmatpush1.msra.mxu0 0.0
    %208 = vmatprep.subr.mxu0 0.0
    %209 = vmatpush1.msra.mxu0 %v183
    %210 = vmatprep.subr.mxu0 0.0
    %211 = vmatpush1.msra.mxu0 %v182
    %212 = vmatprep.subr.mxu0 0.0
    %213 = vmatpush1.msra.mxu0 %v181
    %214 = vmatprep.subr.mxu0 0.0
    %215 = vmatpush1.msra.mxu0 %v180
    %216 = vmatprep.subr.mxu0 0.0
    %217 = vmatpush2.msra.mxu0 0.0
    %218 = vmatprep.subr.mxu0 0.0
    %219 = vmatpush2.msra.mxu0 0.0
    %220 = vmatprep.subr.mxu0 0.0
    %221 = vmatpush2.msra.mxu0 0.0
    %222 = vmatprep.subr.mxu0 0.0
    %223 = vmatpush2.msra.mxu0 0.0
    %224 = vmatprep.subr.mxu0 0.0
    %225 = vmatpush2.msra.mxu0 0.0
    %226 = vmatprep.subr.mxu0 0.0
    %227 = vmatpush2.msra.mxu0 0.0
    %228 = vmatprep.subr.mxu0 0.0
    %229 = vmatpush2.msra.mxu0 0.0
    %230 = vmatprep.subr.mxu0 0.0
    %231 = vmatpush2.msra.mxu0 0.0
    %232 = vmatprep.subr.mxu0 0.0
    %233 = vmatpush2.msra.mxu0 0.0
    %234 = vmatprep.subr.mxu0 0.0
    %235 = vmatpush2.msra.mxu0 0.0
    %236 = vmatprep.subr.mxu0 0.0
    %237 = vmatpush2.msra.mxu0 0.0
    %238 = vmatprep.subr.mxu0 0.0
    %239 = vmatpush2.msra.mxu0 0.0
    %240 = vmatprep.subr.mxu0 0.0
    %241 = vmatpush2.msra.mxu0 0.0
    %242 = vmatprep.subr.mxu0 0.0
    %243 = vmatpush2.msra.mxu0 0.0
    %244 = vmatprep.subr.mxu0 0.0
    %245 = vmatpush2.msra.mxu0 0.0
    %246 = vmatprep.subr.mxu0 0.0
    %247 = vmatpush2.msra.mxu0 0.0
    %248 = vmatprep.mubr.f32.mxu0 0.0
    %249 = vmatmul.mubr.f32.gmra.mxu0 %v100
    %v250 = vpop.f32.mrf.mxu0
    %v251 = vadd.f32 0.0, %v250
    %v252 = vpop.f32.mrf.mxu0
    %253 = vmatprep.mubr.f32.mxu0 0.0
    %254 = vmatmul.mubr.f32.gmra.mxu0 %v103
    %v255 = vpop.f32.mrf.mxu0
    %v256 = vadd.f32 0.0, %v255
    %v257 = vpop.f32.mrf.mxu0
    %258 = vdwg.mxu0
    %v259 = vld [vmem:[#allocation8] sm:$0xff]
    %v260 = vld [vmem:[#allocation8 + $0x8] sm:$0xff]
    %v261 = vld [vmem:[#allocation8 + $0x10] sm:$0xff]
    %v262 = vld [vmem:[#allocation8 + $0x18] sm:$0xff]
    %263 = vmatprep.subr.mxu0 0.0
    %264 = vmatpush1.msra.mxu0 0.0
    %265 = vmatprep.subr.mxu0 0.0
    %266 = vmatpush1.msra.mxu0 0.0
    %267 = vmatprep.subr.mxu0 0.0
    %268 = vmatpush1.msra.mxu0 0.0
    %269 = vmatprep.subr.mxu0 0.0
    %270 = vmatpush1.msra.mxu0 0.0
    %271 = vmatprep.subr.mxu0 0.0
    %272 = vmatpush1.msra.mxu0 0.0
    %273 = vmatprep.subr.mxu0 0.0
    %274 = vmatpush1.msra.mxu0 0.0
    %275 = vmatprep.subr.mxu0 0.0
    %276 = vmatpush1.msra.mxu0 0.0
    %277 = vmatprep.subr.mxu0 0.0
    %278 = vmatpush1.msra.mxu0 0.0
    %279 = vmatprep.subr.mxu0 0.0
    %280 = vmatpush1.msra.mxu0 0.0
    %281 = vmatprep.subr.mxu0 0.0
    %282 = vmatpush1.msra.mxu0 0.0
    %283 = vmatprep.subr.mxu0 0.0
    %284 = vmatpush1.msra.mxu0 0.0
    %285 = vmatprep.subr.mxu0 0.0
    %286 = vmatpush1.msra.mxu0 0.0
    %287 = vmatprep.subr.mxu0 0.0
    %288 = vmatpush1.msra.mxu0 %v262
    %289 = vmatprep.subr.mxu0 0.0
    %290 = vmatpush1.msra.mxu0 %v261
    %291 = vmatprep.subr.mxu0 0.0
    %292 = vmatpush1.msra.mxu0 %v260
    %293 = vmatprep.subr.mxu0 0.0
    %294 = vmatpush1.msra.mxu0 %v259
    %295 = vmatprep.subr.mxu0 0.0
    %296 = vmatpush2.msra.mxu0 0.0
    %297 = vmatprep.subr.mxu0 0.0
    %298 = vmatpush2.msra.mxu0 0.0
    %299 = vmatprep.subr.mxu0 0.0
    %300 = vmatpush2.msra.mxu0 0.0
    %301 = vmatprep.subr.mxu0 0.0
    %302 = vmatpush2.msra.mxu0 0.0
    %303 = vmatprep.subr.mxu0 0.0
    %304 = vmatpush2.msra.mxu0 0.0
    %305 = vmatprep.subr.mxu0 0.0
    %306 = vmatpush2.msra.mxu0 0.0
    %307 = vmatprep.subr.mxu0 0.0
    %308 = vmatpush2.msra.mxu0 0.0
    %309 = vmatprep.subr.mxu0 0.0
    %310 = vmatpush2.msra.mxu0 0.0
    %311 = vmatprep.subr.mxu0 0.0
    %312 = vmatpush2.msra.mxu0 0.0
    %313 = vmatprep.subr.mxu0 0.0
    %314 = vmatpush2.msra.mxu0 0.0
    %315 = vmatprep.subr.mxu0 0.0
    %316 = vmatpush2.msra.mxu0 0.0
    %317 = vmatprep.subr.mxu0 0.0
    %318 = vmatpush2.msra.mxu0 0.0
    %319 = vmatprep.subr.mxu0 0.0
    %320 = vmatpush2.msra.mxu0 0.0
    %321 = vmatprep.subr.mxu0 0.0
    %322 = vmatpush2.msra.mxu0 0.0
    %323 = vmatprep.subr.mxu0 0.0
    %324 = vmatpush2.msra.mxu0 0.0
    %325 = vmatprep.subr.mxu0 0.0
    %326 = vmatpush2.msra.mxu0 0.0
    %327 = vmatprep.mubr.f32.mxu0 0.0
    %328 = vmatmul.mubr.f32.gmra.mxu0 %v100
    %v329 = vpop.f32.mrf.mxu0
    %v330 = vadd.f32 0.0, %v329
    %v331 = vpop.f32.mrf.mxu0
    %332 = vmatprep.mubr.f32.mxu0 0.0
    %333 = vmatmul.mubr.f32.gmra.mxu0 %v103
    %v334 = vpop.f32.mrf.mxu0
    %v335 = vadd.f32 0.0, %v334
    %v336 = vpop.f32.mrf.mxu0
    %337 = vdwg.mxu0
    %vm338 = vcmask 64512
    %v340 = vsel %vm338, %v172, 0
    %v343 = vsel %vm338, %v251, 0
    %345 = vmatprep.subr.mxu0 0.0
    %346 = vmatpush1.xpose.msra.mxu0 0.0
    %347 = vmatprep.subr.mxu0 0.0
    %348 = vmatpush1.xpose.msra.mxu0 0.0
    %349 = vmatprep.subr.mxu0 0.0
    %350 = vmatpush1.xpose.msra.mxu0 0.0
    %351 = vmatprep.subr.mxu0 0.0
    %352 = vmatpush1.xpose.msra.mxu0 0.0
    %353 = vmatprep.subr.mxu0 0.0
    %354 = vmatpush1.xpose.msra.mxu0 0.0
    %355 = vmatprep.subr.mxu0 0.0
    %356 = vmatpush1.xpose.msra.mxu0 0.0
    %357 = vmatprep.subr.mxu0 0.0
    %358 = vmatpush1.xpose.msra.mxu0 0.0
    %359 = vmatprep.subr.mxu0 0.0
    %360 = vmatpush1.xpose.msra.mxu0 0.0
    %361 = vmatprep.subr.mxu0 0.0
    %362 = vmatpush1.xpose.msra.mxu0 0.0
    %363 = vmatprep.subr.mxu0 0.0
    %364 = vmatpush1.xpose.msra.mxu0 0.0
    %365 = vmatprep.subr.mxu0 0.0
    %366 = vmatpush1.xpose.msra.mxu0 0.0
    %367 = vmatprep.subr.mxu0 0.0
    %368 = vmatpush1.xpose.msra.mxu0 0.0
    %369 = vmatprep.subr.mxu0 0.0
    %370 = vmatpush1.xpose.msra.mxu0 0.0
    %371 = vmatprep.subr.mxu0 0.0
    %372 = vmatpush1.xpose.msra.mxu0 0.0
    %373 = vmatprep.subr.mxu0 0.0
    %374 = vmatpush1.xpose.msra.mxu0 0.0
    %375 = vmatprep.subr.mxu0 0.0
    %376 = vmatpush1.xpose.msra.mxu0 %v343
    %377 = vmatprep.subr.mxu0 0.0
    %378 = vmatpush2.xpose.msra.mxu0 0.0
    %379 = vmatprep.subr.mxu0 0.0
    %380 = vmatpush2.xpose.msra.mxu0 0.0
    %381 = vmatprep.subr.mxu0 0.0
    %382 = vmatpush2.xpose.msra.mxu0 0.0
    %383 = vmatprep.subr.mxu0 0.0
    %384 = vmatpush2.xpose.msra.mxu0 0.0
    %385 = vmatprep.subr.mxu0 0.0
    %386 = vmatpush2.xpose.msra.mxu0 0.0
    %387 = vmatprep.subr.mxu0 0.0
    %388 = vmatpush2.xpose.msra.mxu0 0.0
    %389 = vmatprep.subr.mxu0 0.0
    %390 = vmatpush2.xpose.msra.mxu0 0.0
    %391 = vmatprep.subr.mxu0 0.0
    %392 = vmatpush2.xpose.msra.mxu0 0.0
    %393 = vmatprep.subr.mxu0 0.0
    %394 = vmatpush2.xpose.msra.mxu0 0.0
    %395 = vmatprep.subr.mxu0 0.0
    %396 = vmatpush2.xpose.msra.mxu0 0.0
    %397 = vmatprep.subr.mxu0 0.0
    %398 = vmatpush2.xpose.msra.mxu0 0.0
    %399 = vmatprep.subr.mxu0 0.0
    %400 = vmatpush2.xpose.msra.mxu0 0.0
    %401 = vmatprep.subr.mxu0 0.0
    %402 = vmatpush2.xpose.msra.mxu0 0.0
    %403 = vmatprep.subr.mxu0 0.0
    %404 = vmatpush2.xpose.msra.mxu0 0.0
    %405 = vmatprep.subr.mxu0 0.0
    %406 = vmatpush2.xpose.msra.mxu0 0.0
    %407 = vmatprep.subr.mxu0 0.0
    %408 = vmatpush2.xpose.msra.mxu0 0.0
    %409 = vmatprep.mubr.f32.mxu0 0.0
    %410 = vmatmul.mubr.f32.gmra.mxu0 %v340
    %v411 = vpop.f32.mrf.mxu0
    %v412 = vadd.f32 0.0, %v411
    %v413 = vpop.f32.mrf.mxu0
    %414 = vdwg.mxu0
    %v416 = vsel %vm338, %v177, 0
    %v419 = vsel %vm338, %v256, 0
    %421 = vmatprep.subr.mxu0 0.0
    %422 = vmatpush1.xpose.msra.mxu0 0.0
    %423 = vmatprep.subr.mxu0 0.0
    %424 = vmatpush1.xpose.msra.mxu0 0.0
    %425 = vmatprep.subr.mxu0 0.0
    %426 = vmatpush1.xpose.msra.mxu0 0.0
    %427 = vmatprep.subr.mxu0 0.0
    %428 = vmatpush1.xpose.msra.mxu0 0.0
    %429 = vmatprep.subr.mxu0 0.0
    %430 = vmatpush1.xpose.msra.mxu0 0.0
    %431 = vmatprep.subr.mxu0 0.0
    %432 = vmatpush1.xpose.msra.mxu0 0.0
    %433 = vmatprep.subr.mxu0 0.0
    %434 = vmatpush1.xpose.msra.mxu0 0.0
    %435 = vmatprep.subr.mxu0 0.0
    %436 = vmatpush1.xpose.msra.mxu0 0.0
    %437 = vmatprep.subr.mxu0 0.0
    %438 = vmatpush1.xpose.msra.mxu0 0.0
    %439 = vmatprep.subr.mxu0 0.0
    %440 = vmatpush1.xpose.msra.mxu0 0.0
    %441 = vmatprep.subr.mxu0 0.0
    %442 = vmatpush1.xpose.msra.mxu0 0.0
    %443 = vmatprep.subr.mxu0 0.0
    %444 = vmatpush1.xpose.msra.mxu0 0.0
    %445 = vmatprep.subr.mxu0 0.0
    %446 = vmatpush1.xpose.msra.mxu0 0.0
    %447 = vmatprep.subr.mxu0 0.0
    %448 = vmatpush1.xpose.msra.mxu0 0.0
    %449 = vmatprep.subr.mxu0 0.0
    %450 = vmatpush1.xpose.msra.mxu0 0.0
    %451 = vmatprep.subr.mxu0 0.0
    %452 = vmatpush1.xpose.msra.mxu0 %v419
    %453 = vmatprep.subr.mxu0 0.0
    %454 = vmatpush2.xpose.msra.mxu0 0.0
    %455 = vmatprep.subr.mxu0 0.0
    %456 = vmatpush2.xpose.msra.mxu0 0.0
    %457 = vmatprep.subr.mxu0 0.0
    %458 = vmatpush2.xpose.msra.mxu0 0.0
    %459 = vmatprep.subr.mxu0 0.0
    %460 = vmatpush2.xpose.msra.mxu0 0.0
    %461 = vmatprep.subr.mxu0 0.0
    %462 = vmatpush2.xpose.msra.mxu0 0.0
    %463 = vmatprep.subr.mxu0 0.0
    %464 = vmatpush2.xpose.msra.mxu0 0.0
    %465 = vmatprep.subr.mxu0 0.0
    %466 = vmatpush2.xpose.msra.mxu0 0.0
    %467 = vmatprep.subr.mxu0 0.0
    %468 = vmatpush2.xpose.msra.mxu0 0.0
    %469 = vmatprep.subr.mxu0 0.0
    %470 = vmatpush2.xpose.msra.mxu0 0.0
    %471 = vmatprep.subr.mxu0 0.0
    %472 = vmatpush2.xpose.msra.mxu0 0.0
    %473 = vmatprep.subr.mxu0 0.0
    %474 = vmatpush2.xpose.msra.mxu0 0.0
    %475 = vmatprep.subr.mxu0 0.0
    %476 = vmatpush2.xpose.msra.mxu0 0.0
    %477 = vmatprep.subr.mxu0 0.0
    %478 = vmatpush2.xpose.msra.mxu0 0.0
    %479 = vmatprep.subr.mxu0 0.0
    %480 = vmatpush2.xpose.msra.mxu0 0.0
    %481 = vmatprep.subr.mxu0 0.0
    %482 = vmatpush2.xpose.msra.mxu0 0.0
    %483 = vmatprep.subr.mxu0 0.0
    %484 = vmatpush2.xpose.msra.mxu0 0.0
    %485 = vmatprep.mubr.f32.mxu0 0.0
    %486 = vmatmul.mubr.f32.gmra.mxu0 %v416
    %v487 = vpop.f32.mrf.mxu0
    %v488 = vadd.f32 0.0, %v487
    %v489 = vpop.f32.mrf.mxu0
    %490 = vdwg.mxu0
    %v491 = vsel %vm338, %v412, -inf
    %492 = vmax.xlane.f32.xlu0 %v491
    %v493 = vpop.xlane.xlu0 %492
    %v494 = vsel %vm338, %v488, -inf
    %495 = vmax.xlane.f32.xlu0 %v494
    %v496 = vpop.xlane.xlu0 %495
    %v497 = vsub.f32 %v412, %v493
    %v498 = vsub.f32 %v488, %v496
    %v499 = vmul.f32 %v497, 1.442695
    %v500 = vpow.pop %v499
    %v501 = vmul.f32 %v498, 1.442695
    %v502 = vpow.pop %v501
    %v503 = vsel %vm338, %v500, 0.0
    %504 = vadd.xlane.f32.xlu0 %v503
    %v505 = vpop.xlane.xlu0 %504
    %v506 = vsel %vm338, %v502, 0.0
    %507 = vadd.xlane.f32.xlu0 %v506
    %v508 = vpop.xlane.xlu0 %507
    %v509 = vrcp.pop %v505
    %v510 = vrcp.pop %v508
    %v511 = vmul.f32 %v500, %v509
    %v512 = vmul.f32 %v502, %v510
    %v514 = vsel %vm338, %v511, 0
    %516 = vmatprep.subr.mxu0 0.0
    %517 = vmatpush1.msra.mxu0 0.0
    %518 = vmatprep.subr.mxu0 0.0
    %519 = vmatpush1.msra.mxu0 0.0
    %520 = vmatprep.subr.mxu0 0.0
    %521 = vmatpush1.msra.mxu0 0.0
    %522 = vmatprep.subr.mxu0 0.0
    %523 = vmatpush1.msra.mxu0 0.0
    %524 = vmatprep.subr.mxu0 0.0
    %525 = vmatpush1.msra.mxu0 0.0
    %526 = vmatprep.subr.mxu0 0.0
    %527 = vmatpush1.msra.mxu0 0.0
    %528 = vmatprep.subr.mxu0 0.0
    %529 = vmatpush1.msra.mxu0 0.0
    %530 = vmatprep.subr.mxu0 0.0
    %531 = vmatpush1.msra.mxu0 0.0
    %532 = vmatprep.subr.mxu0 0.0
    %533 = vmatpush1.msra.mxu0 0.0
    %534 = vmatprep.subr.mxu0 0.0
    %535 = vmatpush1.msra.mxu0 0.0
    %536 = vmatprep.subr.mxu0 0.0
    %537 = vmatpush1.msra.mxu0 0.0
    %538 = vmatprep.subr.mxu0 0.0
    %539 = vmatpush1.msra.mxu0 0.0
    %540 = vmatprep.subr.mxu0 0.0
    %541 = vmatpush1.msra.mxu0 0.0
    %542 = vmatprep.subr.mxu0 0.0
    %543 = vmatpush1.msra.mxu0 0.0
    %544 = vmatprep.subr.mxu0 0.0
    %545 = vmatpush1.msra.mxu0 0.0
    %546 = vmatprep.subr.mxu0 0.0
    %547 = vmatpush1.msra.mxu0 %v330
    %548 = vmatprep.subr.mxu0 0.0
    %549 = vmatpush2.msra.mxu0 0.0
    %550 = vmatprep.subr.mxu0 0.0
    %551 = vmatpush2.msra.mxu0 0.0
    %552 = vmatprep.subr.mxu0 0.0
    %553 = vmatpush2.msra.mxu0 0.0
    %554 = vmatprep.subr.mxu0 0.0
    %555 = vmatpush2.msra.mxu0 0.0
    %556 = vmatprep.subr.mxu0 0.0
    %557 = vmatpush2.msra.mxu0 0.0
    %558 = vmatprep.subr.mxu0 0.0
    %559 = vmatpush2.msra.mxu0 0.0
    %560 = vmatprep.subr.mxu0 0.0
    %561 = vmatpush2.msra.mxu0 0.0
    %562 = vmatprep.subr.mxu0 0.0
    %563 = vmatpush2.msra.mxu0 0.0
    %564 = vmatprep.subr.mxu0 0.0
    %565 = vmatpush2.msra.mxu0 0.0
    %566 = vmatprep.subr.mxu0 0.0
    %567 = vmatpush2.msra.mxu0 0.0
    %568 = vmatprep.subr.mxu0 0.0
    %569 = vmatpush2.msra.mxu0 0.0
    %570 = vmatprep.subr.mxu0 0.0
    %571 = vmatpush2.msra.mxu0 0.0
    %572 = vmatprep.subr.mxu0 0.0
    %573 = vmatpush2.msra.mxu0 0.0
    %574 = vmatprep.subr.mxu0 0.0
    %575 = vmatpush2.msra.mxu0 0.0
    %576 = vmatprep.subr.mxu0 0.0
    %577 = vmatpush2.msra.mxu0 0.0
    %578 = vmatprep.subr.mxu0 0.0
    %579 = vmatpush2.msra.mxu0 0.0
    %580 = vmatprep.mubr.f32.mxu0 0.0
    %581 = vmatmul.mubr.f32.gmra.mxu0 %v514
    %v582 = vpop.f32.mrf.mxu0
    %v583 = vadd.f32 0.0, %v582
    %v584 = vpop.f32.mrf.mxu0
    %585 = vdwg.mxu0
    %v587 = vsel %vm338, %v512, 0
    %589 = vmatprep.subr.mxu0 0.0
    %590 = vmatpush1.msra.mxu0 0.0
    %591 = vmatprep.subr.mxu0 0.0
    %592 = vmatpush1.msra.mxu0 0.0
    %593 = vmatprep.subr.mxu0 0.0
    %594 = vmatpush1.msra.mxu0 0.0
    %595 = vmatprep.subr.mxu0 0.0
    %596 = vmatpush1.msra.mxu0 0.0
    %597 = vmatprep.subr.mxu0 0.0
    %598 = vmatpush1.msra.mxu0 0.0
    %599 = vmatprep.subr.mxu0 0.0
    %600 = vmatpush1.msra.mxu0 0.0
    %601 = vmatprep.subr.mxu0 0.0
    %602 = vmatpush1.msra.mxu0 0.0
    %603 = vmatprep.subr.mxu0 0.0
    %604 = vmatpush1.msra.mxu0 0.0
    %605 = vmatprep.subr.mxu0 0.0
    %606 = vmatpush1.msra.mxu0 0.0
    %607 = vmatprep.subr.mxu0 0.0
    %608 = vmatpush1.msra.mxu0 0.0
    %609 = vmatprep.subr.mxu0 0.0
    %610 = vmatpush1.msra.mxu0 0.0
    %611 = vmatprep.subr.mxu0 0.0
    %612 = vmatpush1.msra.mxu0 0.0
    %613 = vmatprep.subr.mxu0 0.0
    %614 = vmatpush1.msra.mxu0 0.0
    %615 = vmatprep.subr.mxu0 0.0
    %616 = vmatpush1.msra.mxu0 0.0
    %617 = vmatprep.subr.mxu0 0.0
    %618 = vmatpush1.msra.mxu0 0.0
    %619 = vmatprep.subr.mxu0 0.0
    %620 = vmatpush1.msra.mxu0 %v335
    %621 = vmatprep.subr.mxu0 0.0
    %622 = vmatpush2.msra.mxu0 0.0
    %623 = vmatprep.subr.mxu0 0.0
    %624 = vmatpush2.msra.mxu0 0.0
    %625 = vmatprep.subr.mxu0 0.0
    %626 = vmatpush2.msra.mxu0 0.0
    %627 = vmatprep.subr.mxu0 0.0
    %628 = vmatpush2.msra.mxu0 0.0
    %629 = vmatprep.subr.mxu0 0.0
    %630 = vmatpush2.msra.mxu0 0.0
    %631 = vmatprep.subr.mxu0 0.0
    %632 = vmatpush2.msra.mxu0 0.0
    %633 = vmatprep.subr.mxu0 0.0
    %634 = vmatpush2.msra.mxu0 0.0
    %635 = vmatprep.subr.mxu0 0.0
    %636 = vmatpush2.msra.mxu0 0.0
    %637 = vmatprep.subr.mxu0 0.0
    %638 = vmatpush2.msra.mxu0 0.0
    %639 = vmatprep.subr.mxu0 0.0
    %640 = vmatpush2.msra.mxu0 0.0
    %641 = vmatprep.subr.mxu0 0.0
    %642 = vmatpush2.msra.mxu0 0.0
    %643 = vmatprep.subr.mxu0 0.0
    %644 = vmatpush2.msra.mxu0 0.0
    %645 = vmatprep.subr.mxu0 0.0
    %646 = vmatpush2.msra.mxu0 0.0
    %647 = vmatprep.subr.mxu0 0.0
    %648 = vmatpush2.msra.mxu0 0.0
    %649 = vmatprep.subr.mxu0 0.0
    %650 = vmatpush2.msra.mxu0 0.0
    %651 = vmatprep.subr.mxu0 0.0
    %652 = vmatpush2.msra.mxu0 0.0
    %653 = vmatprep.mubr.f32.mxu0 0.0
    %654 = vmatmul.mubr.f32.gmra.mxu0 %v587
    %v655 = vpop.f32.mrf.mxu0
    %v656 = vadd.f32 0.0, %v655
    %v657 = vpop.f32.mrf.mxu0
    %658 = vdwg.mxu0
    %659 = vrot.lane.b32.xlu0 %v172, 120
    %v660 = vpop.permute.xlu0 %659
    %661 = vrot.lane.b32.xlu0 %v251, 120
    %v662 = vpop.permute.xlu0 %661
    %v663 = vsel %vm338, %v660, 0
    %v665 = vsel %vm338, %v662, 0
    %667 = vmatprep.subr.mxu0 0.0
    %668 = vmatpush1.xpose.msra.mxu0 0.0
    %669 = vmatprep.subr.mxu0 0.0
    %670 = vmatpush1.xpose.msra.mxu0 0.0
    %671 = vmatprep.subr.mxu0 0.0
    %672 = vmatpush1.xpose.msra.mxu0 0.0
    %673 = vmatprep.subr.mxu0 0.0
    %674 = vmatpush1.xpose.msra.mxu0 0.0
    %675 = vmatprep.subr.mxu0 0.0
    %676 = vmatpush1.xpose.msra.mxu0 0.0
    %677 = vmatprep.subr.mxu0 0.0
    %678 = vmatpush1.xpose.msra.mxu0 0.0
    %679 = vmatprep.subr.mxu0 0.0
    %680 = vmatpush1.xpose.msra.mxu0 0.0
    %681 = vmatprep.subr.mxu0 0.0
    %682 = vmatpush1.xpose.msra.mxu0 0.0
    %683 = vmatprep.subr.mxu0 0.0
    %684 = vmatpush1.xpose.msra.mxu0 0.0
    %685 = vmatprep.subr.mxu0 0.0
    %686 = vmatpush1.xpose.msra.mxu0 0.0
    %687 = vmatprep.subr.mxu0 0.0
    %688 = vmatpush1.xpose.msra.mxu0 0.0
    %689 = vmatprep.subr.mxu0 0.0
    %690 = vmatpush1.xpose.msra.mxu0 0.0
    %691 = vmatprep.subr.mxu0 0.0
    %692 = vmatpush1.xpose.msra.mxu0 0.0
    %693 = vmatprep.subr.mxu0 0.0
    %694 = vmatpush1.xpose.msra.mxu0 0.0
    %695 = vmatprep.subr.mxu0 0.0
    %696 = vmatpush1.xpose.msra.mxu0 0.0
    %697 = vmatprep.subr.mxu0 0.0
    %698 = vmatpush1.xpose.msra.mxu0 %v665
    %699 = vmatprep.subr.mxu0 0.0
    %700 = vmatpush2.xpose.msra.mxu0 0.0
    %701 = vmatprep.subr.mxu0 0.0
    %702 = vmatpush2.xpose.msra.mxu0 0.0
    %703 = vmatprep.subr.mxu0 0.0
    %704 = vmatpush2.xpose.msra.mxu0 0.0
    %705 = vmatprep.subr.mxu0 0.0
    %706 = vmatpush2.xpose.msra.mxu0 0.0
    %707 = vmatprep.subr.mxu0 0.0
    %708 = vmatpush2.xpose.msra.mxu0 0.0
    %709 = vmatprep.subr.mxu0 0.0
    %710 = vmatpush2.xpose.msra.mxu0 0.0
    %711 = vmatprep.subr.mxu0 0.0
    %712 = vmatpush2.xpose.msra.mxu0 0.0
    %713 = vmatprep.subr.mxu0 0.0
    %714 = vmatpush2.xpose.msra.mxu0 0.0
    %715 = vmatprep.subr.mxu0 0.0
    %716 = vmatpush2.xpose.msra.mxu0 0.0
    %717 = vmatprep.subr.mxu0 0.0
    %718 = vmatpush2.xpose.msra.mxu0 0.0
    %719 = vmatprep.subr.mxu0 0.0
    %720 = vmatpush2.xpose.msra.mxu0 0.0
    %721 = vmatprep.subr.mxu0 0.0
    %722 = vmatpush2.xpose.msra.mxu0 0.0
    %723 = vmatprep.subr.mxu0 0.0
    %724 = vmatpush2.xpose.msra.mxu0 0.0
    %725 = vmatprep.subr.mxu0 0.0
    %726 = vmatpush2.xpose.msra.mxu0 0.0
    %727 = vmatprep.subr.mxu0 0.0
    %728 = vmatpush2.xpose.msra.mxu0 0.0
    %729 = vmatprep.subr.mxu0 0.0
    %730 = vmatpush2.xpose.msra.mxu0 0.0
    %731 = vmatprep.mubr.f32.mxu0 0.0
    %732 = vmatmul.mubr.f32.gmra.mxu0 %v663
    %v733 = vpop.f32.mrf.mxu0
    %v734 = vadd.f32 0.0, %v733
    %v735 = vpop.f32.mrf.mxu0
    %736 = vdwg.mxu0
    %737 = vrot.lane.b32.xlu0 %v177, 120
    %v738 = vpop.permute.xlu0 %737
    %739 = vrot.lane.b32.xlu0 %v256, 120
    %v740 = vpop.permute.xlu0 %739
    %v741 = vsel %vm338, %v738, 0
    %v743 = vsel %vm338, %v740, 0
    %745 = vmatprep.subr.mxu0 0.0
    %746 = vmatpush1.xpose.msra.mxu0 0.0
    %747 = vmatprep.subr.mxu0 0.0
    %748 = vmatpush1.xpose.msra.mxu0 0.0
    %749 = vmatprep.subr.mxu0 0.0
    %750 = vmatpush1.xpose.msra.mxu0 0.0
    %751 = vmatprep.subr.mxu0 0.0
    %752 = vmatpush1.xpose.msra.mxu0 0.0
    %753 = vmatprep.subr.mxu0 0.0
    %754 = vmatpush1.xpose.msra.mxu0 0.0
    %755 = vmatprep.subr.mxu0 0.0
    %756 = vmatpush1.xpose.msra.mxu0 0.0
    %757 = vmatprep.subr.mxu0 0.0
    %758 = vmatpush1.xpose.msra.mxu0 0.0
    %759 = vmatprep.subr.mxu0 0.0
    %760 = vmatpush1.xpose.msra.mxu0 0.0
    %761 = vmatprep.subr.mxu0 0.0
    %762 = vmatpush1.xpose.msra.mxu0 0.0
    %763 = vmatprep.subr.mxu0 0.0
    %764 = vmatpush1.xpose.msra.mxu0 0.0
    %765 = vmatprep.subr.mxu0 0.0
    %766 = vmatpush1.xpose.msra.mxu0 0.0
    %767 = vmatprep.subr.mxu0 0.0
    %768 = vmatpush1.xpose.msra.mxu0 0.0
    %769 = vmatprep.subr.mxu0 0.0
    %770 = vmatpush1.xpose.msra.mxu0 0.0
    %771 = vmatprep.subr.mxu0 0.0
    %772 = vmatpush1.xpose.msra.mxu0 0.0
    %773 = vmatprep.subr.mxu0 0.0
    %774 = vmatpush1.xpose.msra.mxu0 0.0
    %775 = vmatprep.subr.mxu0 0.0
    %776 = vmatpush1.xpose.msra.mxu0 %v743
    %777 = vmatprep.subr.mxu0 0.0
    %778 = vmatpush2.xpose.msra.mxu0 0.0
    %779 = vmatprep.subr.mxu0 0.0
    %780 = vmatpush2.xpose.msra.mxu0 0.0
    %781 = vmatprep.subr.mxu0 0.0
    %782 = vmatpush2.xpose.msra.mxu0 0.0
    %783 = vmatprep.subr.mxu0 0.0
    %784 = vmatpush2.xpose.msra.mxu0 0.0
    %785 = vmatprep.subr.mxu0 0.0
    %786 = vmatpush2.xpose.msra.mxu0 0.0
    %787 = vmatprep.subr.mxu0 0.0
    %788 = vmatpush2.xpose.msra.mxu0 0.0
    %789 = vmatprep.subr.mxu0 0.0
    %790 = vmatpush2.xpose.msra.mxu0 0.0
    %791 = vmatprep.subr.mxu0 0.0
    %792 = vmatpush2.xpose.msra.mxu0 0.0
    %793 = vmatprep.subr.mxu0 0.0
    %794 = vmatpush2.xpose.msra.mxu0 0.0
    %795 = vmatprep.subr.mxu0 0.0
    %796 = vmatpush2.xpose.msra.mxu0 0.0
    %797 = vmatprep.subr.mxu0 0.0
    %798 = vmatpush2.xpose.msra.mxu0 0.0
    %799 = vmatprep.subr.mxu0 0.0
    %800 = vmatpush2.xpose.msra.mxu0 0.0
    %801 = vmatprep.subr.mxu0 0.0
    %802 = vmatpush2.xpose.msra.mxu0 0.0
    %803 = vmatprep.subr.mxu0 0.0
    %804 = vmatpush2.xpose.msra.mxu0 0.0
    %805 = vmatprep.subr.mxu0 0.0
    %806 = vmatpush2.xpose.msra.mxu0 0.0
    %807 = vmatprep.subr.mxu0 0.0
    %808 = vmatpush2.xpose.msra.mxu0 0.0
    %809 = vmatprep.mubr.f32.mxu0 0.0
    %810 = vmatmul.mubr.f32.gmra.mxu0 %v741
    %v811 = vpop.f32.mrf.mxu0
    %v812 = vadd.f32 0.0, %v811
    %v813 = vpop.f32.mrf.mxu0
    %814 = vdwg.mxu0
    %v815 = vsel %vm338, %v734, -inf
    %816 = vmax.xlane.f32.xlu0 %v815
    %v817 = vpop.xlane.xlu0 %816
    %v818 = vsel %vm338, %v812, -inf
    %819 = vmax.xlane.f32.xlu0 %v818
    %v820 = vpop.xlane.xlu0 %819
    %v821 = vsub.f32 %v734, %v817
    %v822 = vsub.f32 %v812, %v820
    %v823 = vmul.f32 %v821, 1.442695
    %v824 = vpow.pop %v823
    %v825 = vmul.f32 %v822, 1.442695
    %v826 = vpow.pop %v825
    %v827 = vsel %vm338, %v824, 0.0
    %828 = vadd.xlane.f32.xlu0 %v827
    %v829 = vpop.xlane.xlu0 %828
    %v830 = vsel %vm338, %v826, 0.0
    %831 = vadd.xlane.f32.xlu0 %v830
    %v832 = vpop.xlane.xlu0 %831
    %v833 = vrcp.pop %v829
    %v834 = vrcp.pop %v832
    %v835 = vmul.f32 %v824, %v833
    %v836 = vmul.f32 %v826, %v834
    %838 = vrot.lane.b32.xlu0 %v330, 120
    %v839 = vpop.permute.xlu0 %838
    %v842 = vsel %vm338, %v835, 0
    %844 = vmatprep.subr.mxu0 0.0
    %845 = vmatpush1.msra.mxu0 0.0
    %846 = vmatprep.subr.mxu0 0.0
    %847 = vmatpush1.msra.mxu0 0.0
    %848 = vmatprep.subr.mxu0 0.0
    %849 = vmatpush1.msra.mxu0 0.0
    %850 = vmatprep.subr.mxu0 0.0
    %851 = vmatpush1.msra.mxu0 0.0
    %852 = vmatprep.subr.mxu0 0.0
    %853 = vmatpush1.msra.mxu0 0.0
    %854 = vmatprep.subr.mxu0 0.0
    %855 = vmatpush1.msra.mxu0 0.0
    %856 = vmatprep.subr.mxu0 0.0
    %857 = vmatpush1.msra.mxu0 0.0
    %858 = vmatprep.subr.mxu0 0.0
    %859 = vmatpush1.msra.mxu0 0.0
    %860 = vmatprep.subr.mxu0 0.0
    %861 = vmatpush1.msra.mxu0 0.0
    %862 = vmatprep.subr.mxu0 0.0
    %863 = vmatpush1.msra.mxu0 0.0
    %864 = vmatprep.subr.mxu0 0.0
    %865 = vmatpush1.msra.mxu0 0.0
    %866 = vmatprep.subr.mxu0 0.0
    %867 = vmatpush1.msra.mxu0 0.0
    %868 = vmatprep.subr.mxu0 0.0
    %869 = vmatpush1.msra.mxu0 0.0
    %870 = vmatprep.subr.mxu0 0.0
    %871 = vmatpush1.msra.mxu0 0.0
    %872 = vmatprep.subr.mxu0 0.0
    %873 = vmatpush1.msra.mxu0 0.0
    %874 = vmatprep.subr.mxu0 0.0
    %875 = vmatpush1.msra.mxu0 %v839
    %876 = vmatprep.subr.mxu0 0.0
    %877 = vmatpush2.msra.mxu0 0.0
    %878 = vmatprep.subr.mxu0 0.0
    %879 = vmatpush2.msra.mxu0 0.0
    %880 = vmatprep.subr.mxu0 0.0
    %881 = vmatpush2.msra.mxu0 0.0
    %882 = vmatprep.subr.mxu0 0.0
    %883 = vmatpush2.msra.mxu0 0.0
    %884 = vmatprep.subr.mxu0 0.0
    %885 = vmatpush2.msra.mxu0 0.0
    %886 = vmatprep.subr.mxu0 0.0
    %887 = vmatpush2.msra.mxu0 0.0
    %888 = vmatprep.subr.mxu0 0.0
    %889 = vmatpush2.msra.mxu0 0.0
    %890 = vmatprep.subr.mxu0 0.0
    %891 = vmatpush2.msra.mxu0 0.0
    %892 = vmatprep.subr.mxu0 0.0
    %893 = vmatpush2.msra.mxu0 0.0
    %894 = vmatprep.subr.mxu0 0.0
    %895 = vmatpush2.msra.mxu0 0.0
    %896 = vmatprep.subr.mxu0 0.0
    %897 = vmatpush2.msra.mxu0 0.0
    %898 = vmatprep.subr.mxu0 0.0
    %899 = vmatpush2.msra.mxu0 0.0
    %900 = vmatprep.subr.mxu0 0.0
    %901 = vmatpush2.msra.mxu0 0.0
    %902 = vmatprep.subr.mxu0 0.0
    %903 = vmatpush2.msra.mxu0 0.0
    %904 = vmatprep.subr.mxu0 0.0
    %905 = vmatpush2.msra.mxu0 0.0
    %906 = vmatprep.subr.mxu0 0.0
    %907 = vmatpush2.msra.mxu0 0.0
    %908 = vmatprep.mubr.f32.mxu0 0.0
    %909 = vmatmul.mubr.f32.gmra.mxu0 %v842
    %v910 = vpop.f32.mrf.mxu0
    %v911 = vadd.f32 0.0, %v910
    %v912 = vpop.f32.mrf.mxu0
    %913 = vdwg.mxu0
    %915 = vrot.lane.b32.xlu0 %v335, 120
    %v916 = vpop.permute.xlu0 %915
    %v919 = vsel %vm338, %v836, 0
    %921 = vmatprep.subr.mxu0 0.0
    %922 = vmatpush1.msra.mxu0 0.0
    %923 = vmatprep.subr.mxu0 0.0
    %924 = vmatpush1.msra.mxu0 0.0
    %925 = vmatprep.subr.mxu0 0.0
    %926 = vmatpush1.msra.mxu0 0.0
    %927 = vmatprep.subr.mxu0 0.0
    %928 = vmatpush1.msra.mxu0 0.0
    %929 = vmatprep.subr.mxu0 0.0
    %930 = vmatpush1.msra.mxu0 0.0
    %931 = vmatprep.subr.mxu0 0.0
    %932 = vmatpush1.msra.mxu0 0.0
    %933 = vmatprep.subr.mxu0 0.0
    %934 = vmatpush1.msra.mxu0 0.0
    %935 = vmatprep.subr.mxu0 0.0
    %936 = vmatpush1.msra.mxu0 0.0
    %937 = vmatprep.subr.mxu0 0.0
    %938 = vmatpush1.msra.mxu0 0.0
    %939 = vmatprep.subr.mxu0 0.0
    %940 = vmatpush1.msra.mxu0 0.0
    %941 = vmatprep.subr.mxu0 0.0
    %942 = vmatpush1.msra.mxu0 0.0
    %943 = vmatprep.subr.mxu0 0.0
    %944 = vmatpush1.msra.mxu0 0.0
    %945 = vmatprep.subr.mxu0 0.0
    %946 = vmatpush1.msra.mxu0 0.0
    %947 = vmatprep.subr.mxu0 0.0
    %948 = vmatpush1.msra.mxu0 0.0
    %949 = vmatprep.subr.mxu0 0.0
    %950 = vmatpush1.msra.mxu0 0.0
    %951 = vmatprep.subr.mxu0 0.0
    %952 = vmatpush1.msra.mxu0 %v916
    %953 = vmatprep.subr.mxu0 0.0
    %954 = vmatpush2.msra.mxu0 0.0
    %955 = vmatprep.subr.mxu0 0.0
    %956 = vmatpush2.msra.mxu0 0.0
    %957 = vmatprep.subr.mxu0 0.0
    %958 = vmatpush2.msra.mxu0 0.0
    %959 = vmatprep.subr.mxu0 0.0
    %960 = vmatpush2.msra.mxu0 0.0
    %961 = vmatprep.subr.mxu0 0.0
    %962 = vmatpush2.msra.mxu0 0.0
    %963 = vmatprep.subr.mxu0 0.0
    %964 = vmatpush2.msra.mxu0 0.0
    %965 = vmatprep.subr.mxu0 0.0
    %966 = vmatpush2.msra.mxu0 0.0
    %967 = vmatprep.subr.mxu0 0.0
    %968 = vmatpush2.msra.mxu0 0.0
    %969 = vmatprep.subr.mxu0 0.0
    %970 = vmatpush2.msra.mxu0 0.0
    %971 = vmatprep.subr.mxu0 0.0
    %972 = vmatpush2.msra.mxu0 0.0
    %973 = vmatprep.subr.mxu0 0.0
    %974 = vmatpush2.msra.mxu0 0.0
    %975 = vmatprep.subr.mxu0 0.0
    %976 = vmatpush2.msra.mxu0 0.0
    %977 = vmatprep.subr.mxu0 0.0
    %978 = vmatpush2.msra.mxu0 0.0
    %979 = vmatprep.subr.mxu0 0.0
    %980 = vmatpush2.msra.mxu0 0.0
    %981 = vmatprep.subr.mxu0 0.0
    %982 = vmatpush2.msra.mxu0 0.0
    %983 = vmatprep.subr.mxu0 0.0
    %984 = vmatpush2.msra.mxu0 0.0
    %985 = vmatprep.mubr.f32.mxu0 0.0
    %986 = vmatmul.mubr.f32.gmra.mxu0 %v919
    %v987 = vpop.f32.mrf.mxu0
    %v988 = vadd.f32 0.0, %v987
    %v989 = vpop.f32.mrf.mxu0
    %990 = vdwg.mxu0
    %991 = vrot.lane.b32.xlu0 %v172, 112
    %v992 = vpop.permute.xlu0 %991
    %993 = vrot.lane.b32.xlu0 %v251, 112
    %v994 = vpop.permute.xlu0 %993
    %v995 = vsel %vm338, %v992, 0
    %v997 = vsel %vm338, %v994, 0
    %999 = vmatprep.subr.mxu0 0.0
    %1000 = vmatpush1.xpose.msra.mxu0 0.0
    %1001 = vmatprep.subr.mxu0 0.0
    %1002 = vmatpush1.xpose.msra.mxu0 0.0
    %1003 = vmatprep.subr.mxu0 0.0
    %1004 = vmatpush1.xpose.msra.mxu0 0.0
    %1005 = vmatprep.subr.mxu0 0.0
    %1006 = vmatpush1.xpose.msra.mxu0 0.0
    %1007 = vmatprep.subr.mxu0 0.0
    %1008 = vmatpush1.xpose.msra.mxu0 0.0
    %1009 = vmatprep.subr.mxu0 0.0
    %1010 = vmatpush1.xpose.msra.mxu0 0.0
    %1011 = vmatprep.subr.mxu0 0.0
    %1012 = vmatpush1.xpose.msra.mxu0 0.0
    %1013 = vmatprep.subr.mxu0 0.0
    %1014 = vmatpush1.xpose.msra.mxu0 0.0
    %1015 = vmatprep.subr.mxu0 0.0
    %1016 = vmatpush1.xpose.msra.mxu0 0.0
    %1017 = vmatprep.subr.mxu0 0.0
    %1018 = vmatpush1.xpose.msra.mxu0 0.0
    %1019 = vmatprep.subr.mxu0 0.0
    %1020 = vmatpush1.xpose.msra.mxu0 0.0
    %1021 = vmatprep.subr.mxu0 0.0
    %1022 = vmatpush1.xpose.msra.mxu0 0.0
    %1023 = vmatprep.subr.mxu0 0.0
    %1024 = vmatpush1.xpose.msra.mxu0 0.0
    %1025 = vmatprep.subr.mxu0 0.0
    %1026 = vmatpush1.xpose.msra.mxu0 0.0
    %1027 = vmatprep.subr.mxu0 0.0
    %1028 = vmatpush1.xpose.msra.mxu0 0.0
    %1029 = vmatprep.subr.mxu0 0.0
    %1030 = vmatpush1.xpose.msra.mxu0 %v997
    %1031 = vmatprep.subr.mxu0 0.0
    %1032 = vmatpush2.xpose.msra.mxu0 0.0
    %1033 = vmatprep.subr.mxu0 0.0
    %1034 = vmatpush2.xpose.msra.mxu0 0.0
    %1035 = vmatprep.subr.mxu0 0.0
    %1036 = vmatpush2.xpose.msra.mxu0 0.0
    %1037 = vmatprep.subr.mxu0 0.0
    %1038 = vmatpush2.xpose.msra.mxu0 0.0
    %1039 = vmatprep.subr.mxu0 0.0
    %1040 = vmatpush2.xpose.msra.mxu0 0.0
    %1041 = vmatprep.subr.mxu0 0.0
    %1042 = vmatpush2.xpose.msra.mxu0 0.0
    %1043 = vmatprep.subr.mxu0 0.0
    %1044 = vmatpush2.xpose.msra.mxu0 0.0
    %1045 = vmatprep.subr.mxu0 0.0
    %1046 = vmatpush2.xpose.msra.mxu0 0.0
    %1047 = vmatprep.subr.mxu0 0.0
    %1048 = vmatpush2.xpose.msra.mxu0 0.0
    %1049 = vmatprep.subr.mxu0 0.0
    %1050 = vmatpush2.xpose.msra.mxu0 0.0
    %1051 = vmatprep.subr.mxu0 0.0
    %1052 = vmatpush2.xpose.msra.mxu0 0.0
    %1053 = vmatprep.subr.mxu0 0.0
    %1054 = vmatpush2.xpose.msra.mxu0 0.0
    %1055 = vmatprep.subr.mxu0 0.0
    %1056 = vmatpush2.xpose.msra.mxu0 0.0
    %1057 = vmatprep.subr.mxu0 0.0
    %1058 = vmatpush2.xpose.msra.mxu0 0.0
    %1059 = vmatprep.subr.mxu0 0.0
    %1060 = vmatpush2.xpose.msra.mxu0 0.0
    %1061 = vmatprep.subr.mxu0 0.0
    %1062 = vmatpush2.xpose.msra.mxu0 0.0
    %1063 = vmatprep.mubr.f32.mxu0 0.0
    %1064 = vmatmul.mubr.f32.gmra.mxu0 %v995
    %v1065 = vpop.f32.mrf.mxu0
    %v1066 = vadd.f32 0.0, %v1065
    %v1067 = vpop.f32.mrf.mxu0
    %1068 = vdwg.mxu0
    %1069 = vrot.lane.b32.xlu0 %v177, 112
    %v1070 = vpop.permute.xlu0 %1069
    %1071 = vrot.lane.b32.xlu0 %v256, 112
    %v1072 = vpop.permute.xlu0 %1071
    %v1073 = vsel %vm338, %v1070, 0
    %v1075 = vsel %vm338, %v1072, 0
    %1077 = vmatprep.subr.mxu0 0.0
    %1078 = vmatpush1.xpose.msra.mxu0 0.0
    %1079 = vmatprep.subr.mxu0 0.0
    %1080 = vmatpush1.xpose.msra.mxu0 0.0
    %1081 = vmatprep.subr.mxu0 0.0
    %1082 = vmatpush1.xpose.msra.mxu0 0.0
    %1083 = vmatprep.subr.mxu0 0.0
    %1084 = vmatpush1.xpose.msra.mxu0 0.0
    %1085 = vmatprep.subr.mxu0 0.0
    %1086 = vmatpush1.xpose.msra.mxu0 0.0
    %1087 = vmatprep.subr.mxu0 0.0
    %1088 = vmatpush1.xpose.msra.mxu0 0.0
    %1089 = vmatprep.subr.mxu0 0.0
    %1090 = vmatpush1.xpose.msra.mxu0 0.0
    %1091 = vmatprep.subr.mxu0 0.0
    %1092 = vmatpush1.xpose.msra.mxu0 0.0
    %1093 = vmatprep.subr.mxu0 0.0
    %1094 = vmatpush1.xpose.msra.mxu0 0.0
    %1095 = vmatprep.subr.mxu0 0.0
    %1096 = vmatpush1.xpose.msra.mxu0 0.0
    %1097 = vmatprep.subr.mxu0 0.0
    %1098 = vmatpush1.xpose.msra.mxu0 0.0
    %1099 = vmatprep.subr.mxu0 0.0
    %1100 = vmatpush1.xpose.msra.mxu0 0.0
    %1101 = vmatprep.subr.mxu0 0.0
    %1102 = vmatpush1.xpose.msra.mxu0 0.0
    %1103 = vmatprep.subr.mxu0 0.0
    %1104 = vmatpush1.xpose.msra.mxu0 0.0
    %1105 = vmatprep.subr.mxu0 0.0
    %1106 = vmatpush1.xpose.msra.mxu0 0.0
    %1107 = vmatprep.subr.mxu0 0.0
    %1108 = vmatpush1.xpose.msra.mxu0 %v1075
    %1109 = vmatprep.subr.mxu0 0.0
    %1110 = vmatpush2.xpose.msra.mxu0 0.0
    %1111 = vmatprep.subr.mxu0 0.0
    %1112 = vmatpush2.xpose.msra.mxu0 0.0
    %1113 = vmatprep.subr.mxu0 0.0
    %1114 = vmatpush2.xpose.msra.mxu0 0.0
    %1115 = vmatprep.subr.mxu0 0.0
    %1116 = vmatpush2.xpose.msra.mxu0 0.0
    %1117 = vmatprep.subr.mxu0 0.0
    %1118 = vmatpush2.xpose.msra.mxu0 0.0
    %1119 = vmatprep.subr.mxu0 0.0
    %1120 = vmatpush2.xpose.msra.mxu0 0.0
    %1121 = vmatprep.subr.mxu0 0.0
    %1122 = vmatpush2.xpose.msra.mxu0 0.0
    %1123 = vmatprep.subr.mxu0 0.0
    %1124 = vmatpush2.xpose.msra.mxu0 0.0
    %1125 = vmatprep.subr.mxu0 0.0
    %1126 = vmatpush2.xpose.msra.mxu0 0.0
    %1127 = vmatprep.subr.mxu0 0.0
    %1128 = vmatpush2.xpose.msra.mxu0 0.0
    %1129 = vmatprep.subr.mxu0 0.0
    %1130 = vmatpush2.xpose.msra.mxu0 0.0
    %1131 = vmatprep.subr.mxu0 0.0
    %1132 = vmatpush2.xpose.msra.mxu0 0.0
    %1133 = vmatprep.subr.mxu0 0.0
    %1134 = vmatpush2.xpose.msra.mxu0 0.0
    %1135 = vmatprep.subr.mxu0 0.0
    %1136 = vmatpush2.xpose.msra.mxu0 0.0
    %1137 = vmatprep.subr.mxu0 0.0
    %1138 = vmatpush2.xpose.msra.mxu0 0.0
    %1139 = vmatprep.subr.mxu0 0.0
    %1140 = vmatpush2.xpose.msra.mxu0 0.0
    %1141 = vmatprep.mubr.f32.mxu0 0.0
    %1142 = vmatmul.mubr.f32.gmra.mxu0 %v1073
    %v1143 = vpop.f32.mrf.mxu0
    %v1144 = vadd.f32 0.0, %v1143
    %v1145 = vpop.f32.mrf.mxu0
    %1146 = vdwg.mxu0
    %v1147 = vsel %vm338, %v1066, -inf
    %1148 = vmax.xlane.f32.xlu0 %v1147
    %v1149 = vpop.xlane.xlu0 %1148
    %v1150 = vsel %vm338, %v1144, -inf
    %1151 = vmax.xlane.f32.xlu0 %v1150
    %v1152 = vpop.xlane.xlu0 %1151
    %v1153 = vsub.f32 %v1066, %v1149
    %v1154 = vsub.f32 %v1144, %v1152
    %v1155 = vmul.f32 %v1153, 1.442695
    %v1156 = vpow.pop %v1155
    %v1157 = vmul.f32 %v1154, 1.442695
    %v1158 = vpow.pop %v1157
    %v1159 = vsel %vm338, %v1156, 0.0
    %1160 = vadd.xlane.f32.xlu0 %v1159
    %v1161 = vpop.xlane.xlu0 %1160
    %v1162 = vsel %vm338, %v1158, 0.0
    %1163 = vadd.xlane.f32.xlu0 %v1162
    %v1164 = vpop.xlane.xlu0 %1163
    %v1165 = vrcp.pop %v1161
    %v1166 = vrcp.pop %v1164
    %v1167 = vmul.f32 %v1156, %v1165
    %v1168 = vmul.f32 %v1158, %v1166
    %1169 = vrot.lane.b32.xlu0 %v330, 112
    %v1170 = vpop.permute.xlu0 %1169
    %v1173 = vsel %vm338, %v1167, 0
    %1175 = vmatprep.subr.mxu0 0.0
    %1176 = vmatpush1.msra.mxu0 0.0
    %1177 = vmatprep.subr.mxu0 0.0
    %1178 = vmatpush1.msra.mxu0 0.0
    %1179 = vmatprep.subr.mxu0 0.0
    %1180 = vmatpush1.msra.mxu0 0.0
    %1181 = vmatprep.subr.mxu0 0.0
    %1182 = vmatpush1.msra.mxu0 0.0
    %1183 = vmatprep.subr.mxu0 0.0
    %1184 = vmatpush1.msra.mxu0 0.0
    %1185 = vmatprep.subr.mxu0 0.0
    %1186 = vmatpush1.msra.mxu0 0.0
    %1187 = vmatprep.subr.mxu0 0.0
    %1188 = vmatpush1.msra.mxu0 0.0
    %1189 = vmatprep.subr.mxu0 0.0
    %1190 = vmatpush1.msra.mxu0 0.0
    %1191 = vmatprep.subr.mxu0 0.0
    %1192 = vmatpush1.msra.mxu0 0.0
    %1193 = vmatprep.subr.mxu0 0.0
    %1194 = vmatpush1.msra.mxu0 0.0
    %1195 = vmatprep.subr.mxu0 0.0
    %1196 = vmatpush1.msra.mxu0 0.0
    %1197 = vmatprep.subr.mxu0 0.0
    %1198 = vmatpush1.msra.mxu0 0.0
    %1199 = vmatprep.subr.mxu0 0.0
    %1200 = vmatpush1.msra.mxu0 0.0
    %1201 = vmatprep.subr.mxu0 0.0
    %1202 = vmatpush1.msra.mxu0 0.0
    %1203 = vmatprep.subr.mxu0 0.0
    %1204 = vmatpush1.msra.mxu0 0.0
    %1205 = vmatprep.subr.mxu0 0.0
    %1206 = vmatpush1.msra.mxu0 %v1170
    %1207 = vmatprep.subr.mxu0 0.0
    %1208 = vmatpush2.msra.mxu0 0.0
    %1209 = vmatprep.subr.mxu0 0.0
    %1210 = vmatpush2.msra.mxu0 0.0
    %1211 = vmatprep.subr.mxu0 0.0
    %1212 = vmatpush2.msra.mxu0 0.0
    %1213 = vmatprep.subr.mxu0 0.0
    %1214 = vmatpush2.msra.mxu0 0.0
    %1215 = vmatprep.subr.mxu0 0.0
    %1216 = vmatpush2.msra.mxu0 0.0
    %1217 = vmatprep.subr.mxu0 0.0
    %1218 = vmatpush2.msra.mxu0 0.0
    %1219 = vmatprep.subr.mxu0 0.0
    %1220 = vmatpush2.msra.mxu0 0.0
    %1221 = vmatprep.subr.mxu0 0.0
    %1222 = vmatpush2.msra.mxu0 0.0
    %1223 = vmatprep.subr.mxu0 0.0
    %1224 = vmatpush2.msra.mxu0 0.0
    %1225 = vmatprep.subr.mxu0 0.0
    %1226 = vmatpush2.msra.mxu0 0.0
    %1227 = vmatprep.subr.mxu0 0.0
    %1228 = vmatpush2.msra.mxu0 0.0
    %1229 = vmatprep.subr.mxu0 0.0
    %1230 = vmatpush2.msra.mxu0 0.0
    %1231 = vmatprep.subr.mxu0 0.0
    %1232 = vmatpush2.msra.mxu0 0.0
    %1233 = vmatprep.subr.mxu0 0.0
    %1234 = vmatpush2.msra.mxu0 0.0
    %1235 = vmatprep.subr.mxu0 0.0
    %1236 = vmatpush2.msra.mxu0 0.0
    %1237 = vmatprep.subr.mxu0 0.0
    %1238 = vmatpush2.msra.mxu0 0.0
    %1239 = vmatprep.mubr.f32.mxu0 0.0
    %1240 = vmatmul.mubr.f32.gmra.mxu0 %v1173
    %v1241 = vpop.f32.mrf.mxu0
    %v1242 = vadd.f32 0.0, %v1241
    %v1243 = vpop.f32.mrf.mxu0
    %1244 = vdwg.mxu0
    %1245 = vrot.lane.b32.xlu0 %v335, 112
    %v1246 = vpop.permute.xlu0 %1245
    %v1249 = vsel %vm338, %v1168, 0
    %1251 = vmatprep.subr.mxu0 0.0
    %1252 = vmatpush1.msra.mxu0 0.0
    %1253 = vmatprep.subr.mxu0 0.0
    %1254 = vmatpush1.msra.mxu0 0.0
    %1255 = vmatprep.subr.mxu0 0.0
    %1256 = vmatpush1.msra.mxu0 0.0
    %1257 = vmatprep.subr.mxu0 0.0
    %1258 = vmatpush1.msra.mxu0 0.0
    %1259 = vmatprep.subr.mxu0 0.0
    %1260 = vmatpush1.msra.mxu0 0.0
    %1261 = vmatprep.subr.mxu0 0.0
    %1262 = vmatpush1.msra.mxu0 0.0
    %1263 = vmatprep.subr.mxu0 0.0
    %1264 = vmatpush1.msra.mxu0 0.0
    %1265 = vmatprep.subr.mxu0 0.0
    %1266 = vmatpush1.msra.mxu0 0.0
    %1267 = vmatprep.subr.mxu0 0.0
    %1268 = vmatpush1.msra.mxu0 0.0
    %1269 = vmatprep.subr.mxu0 0.0
    %1270 = vmatpush1.msra.mxu0 0.0
    %1271 = vmatprep.subr.mxu0 0.0
    %1272 = vmatpush1.msra.mxu0 0.0
    %1273 = vmatprep.subr.mxu0 0.0
    %1274 = vmatpush1.msra.mxu0 0.0
    %1275 = vmatprep.subr.mxu0 0.0
    %1276 = vmatpush1.msra.mxu0 0.0
    %1277 = vmatprep.subr.mxu0 0.0
    %1278 = vmatpush1.msra.mxu0 0.0
    %1279 = vmatprep.subr.mxu0 0.0
    %1280 = vmatpush1.msra.mxu0 0.0
    %1281 = vmatprep.subr.mxu0 0.0
    %1282 = vmatpush1.msra.mxu0 %v1246
    %1283 = vmatprep.subr.mxu0 0.0
    %1284 = vmatpush2.msra.mxu0 0.0
    %1285 = vmatprep.subr.mxu0 0.0
    %1286 = vmatpush2.msra.mxu0 0.0
    %1287 = vmatprep.subr.mxu0 0.0
    %1288 = vmatpush2.msra.mxu0 0.0
    %1289 = vmatprep.subr.mxu0 0.0
    %1290 = vmatpush2.msra.mxu0 0.0
    %1291 = vmatprep.subr.mxu0 0.0
    %1292 = vmatpush2.msra.mxu0 0.0
    %1293 = vmatprep.subr.mxu0 0.0
    %1294 = vmatpush2.msra.mxu0 0.0
    %1295 = vmatprep.subr.mxu0 0.0
    %1296 = vmatpush2.msra.mxu0 0.0
    %1297 = vmatprep.subr.mxu0 0.0
    %1298 = vmatpush2.msra.mxu0 0.0
    %1299 = vmatprep.subr.mxu0 0.0
    %1300 = vmatpush2.msra.mxu0 0.0
    %1301 = vmatprep.subr.mxu0 0.0
    %1302 = vmatpush2.msra.mxu0 0.0
    %1303 = vmatprep.subr.mxu0 0.0
    %1304 = vmatpush2.msra.mxu0 0.0
    %1305 = vmatprep.subr.mxu0 0.0
    %1306 = vmatpush2.msra.mxu0 0.0
    %1307 = vmatprep.subr.mxu0 0.0
    %1308 = vmatpush2.msra.mxu0 0.0
    %1309 = vmatprep.subr.mxu0 0.0
    %1310 = vmatpush2.msra.mxu0 0.0
    %1311 = vmatprep.subr.mxu0 0.0
    %1312 = vmatpush2.msra.mxu0 0.0
    %1313 = vmatprep.subr.mxu0 0.0
    %1314 = vmatpush2.msra.mxu0 0.0
    %1315 = vmatprep.mubr.f32.mxu0 0.0
    %1316 = vmatmul.mubr.f32.gmra.mxu0 %v1249
    %v1317 = vpop.f32.mrf.mxu0
    %v1318 = vadd.f32 0.0, %v1317
    %v1319 = vpop.f32.mrf.mxu0
    %1320 = vdwg.mxu0
    %1321 = vrot.lane.b32.xlu0 %v172, 104
    %v1322 = vpop.permute.xlu0 %1321
    %1323 = vrot.lane.b32.xlu0 %v251, 104
    %v1324 = vpop.permute.xlu0 %1323
    %v1325 = vsel %vm338, %v1322, 0
    %v1327 = vsel %vm338, %v1324, 0
    %1329 = vmatprep.subr.mxu0 0.0
    %1330 = vmatpush1.xpose.msra.mxu0 0.0
    %1331 = vmatprep.subr.mxu0 0.0
    %1332 = vmatpush1.xpose.msra.mxu0 0.0
    %1333 = vmatprep.subr.mxu0 0.0
    %1334 = vmatpush1.xpose.msra.mxu0 0.0
    %1335 = vmatprep.subr.mxu0 0.0
    %1336 = vmatpush1.xpose.msra.mxu0 0.0
    %1337 = vmatprep.subr.mxu0 0.0
    %1338 = vmatpush1.xpose.msra.mxu0 0.0
    %1339 = vmatprep.subr.mxu0 0.0
    %1340 = vmatpush1.xpose.msra.mxu0 0.0
    %1341 = vmatprep.subr.mxu0 0.0
    %1342 = vmatpush1.xpose.msra.mxu0 0.0
    %1343 = vmatprep.subr.mxu0 0.0
    %1344 = vmatpush1.xpose.msra.mxu0 0.0
    %1345 = vmatprep.subr.mxu0 0.0
    %1346 = vmatpush1.xpose.msra.mxu0 0.0
    %1347 = vmatprep.subr.mxu0 0.0
    %1348 = vmatpush1.xpose.msra.mxu0 0.0
    %1349 = vmatprep.subr.mxu0 0.0
    %1350 = vmatpush1.xpose.msra.mxu0 0.0
    %1351 = vmatprep.subr.mxu0 0.0
    %1352 = vmatpush1.xpose.msra.mxu0 0.0
    %1353 = vmatprep.subr.mxu0 0.0
    %1354 = vmatpush1.xpose.msra.mxu0 0.0
    %1355 = vmatprep.subr.mxu0 0.0
    %1356 = vmatpush1.xpose.msra.mxu0 0.0
    %1357 = vmatprep.subr.mxu0 0.0
    %1358 = vmatpush1.xpose.msra.mxu0 0.0
    %1359 = vmatprep.subr.mxu0 0.0
    %1360 = vmatpush1.xpose.msra.mxu0 %v1327
    %1361 = vmatprep.subr.mxu0 0.0
    %1362 = vmatpush2.xpose.msra.mxu0 0.0
    %1363 = vmatprep.subr.mxu0 0.0
    %1364 = vmatpush2.xpose.msra.mxu0 0.0
    %1365 = vmatprep.subr.mxu0 0.0
    %1366 = vmatpush2.xpose.msra.mxu0 0.0
    %1367 = vmatprep.subr.mxu0 0.0
    %1368 = vmatpush2.xpose.msra.mxu0 0.0
    %1369 = vmatprep.subr.mxu0 0.0
    %1370 = vmatpush2.xpose.msra.mxu0 0.0
    %1371 = vmatprep.subr.mxu0 0.0
    %1372 = vmatpush2.xpose.msra.mxu0 0.0
    %1373 = vmatprep.subr.mxu0 0.0
    %1374 = vmatpush2.xpose.msra.mxu0 0.0
    %1375 = vmatprep.subr.mxu0 0.0
    %1376 = vmatpush2.xpose.msra.mxu0 0.0
    %1377 = vmatprep.subr.mxu0 0.0
    %1378 = vmatpush2.xpose.msra.mxu0 0.0
    %1379 = vmatprep.subr.mxu0 0.0
    %1380 = vmatpush2.xpose.msra.mxu0 0.0
    %1381 = vmatprep.subr.mxu0 0.0
    %1382 = vmatpush2.xpose.msra.mxu0 0.0
    %1383 = vmatprep.subr.mxu0 0.0
    %1384 = vmatpush2.xpose.msra.mxu0 0.0
    %1385 = vmatprep.subr.mxu0 0.0
    %1386 = vmatpush2.xpose.msra.mxu0 0.0
    %1387 = vmatprep.subr.mxu0 0.0
    %1388 = vmatpush2.xpose.msra.mxu0 0.0
    %1389 = vmatprep.subr.mxu0 0.0
    %1390 = vmatpush2.xpose.msra.mxu0 0.0
    %1391 = vmatprep.subr.mxu0 0.0
    %1392 = vmatpush2.xpose.msra.mxu0 0.0
    %1393 = vmatprep.mubr.f32.mxu0 0.0
    %1394 = vmatmul.mubr.f32.gmra.mxu0 %v1325
    %v1395 = vpop.f32.mrf.mxu0
    %v1396 = vadd.f32 0.0, %v1395
    %v1397 = vpop.f32.mrf.mxu0
    %1398 = vdwg.mxu0
    %1399 = vrot.lane.b32.xlu0 %v177, 104
    %v1400 = vpop.permute.xlu0 %1399
    %1401 = vrot.lane.b32.xlu0 %v256, 104
    %v1402 = vpop.permute.xlu0 %1401
    %v1403 = vsel %vm338, %v1400, 0
    %v1405 = vsel %vm338, %v1402, 0
    %1407 = vmatprep.subr.mxu0 0.0
    %1408 = vmatpush1.xpose.msra.mxu0 0.0
    %1409 = vmatprep.subr.mxu0 0.0
    %1410 = vmatpush1.xpose.msra.mxu0 0.0
    %1411 = vmatprep.subr.mxu0 0.0
    %1412 = vmatpush1.xpose.msra.mxu0 0.0
    %1413 = vmatprep.subr.mxu0 0.0
    %1414 = vmatpush1.xpose.msra.mxu0 0.0
    %1415 = vmatprep.subr.mxu0 0.0
    %1416 = vmatpush1.xpose.msra.mxu0 0.0
    %1417 = vmatprep.subr.mxu0 0.0
    %1418 = vmatpush1.xpose.msra.mxu0 0.0
    %1419 = vmatprep.subr.mxu0 0.0
    %1420 = vmatpush1.xpose.msra.mxu0 0.0
    %1421 = vmatprep.subr.mxu0 0.0
    %1422 = vmatpush1.xpose.msra.mxu0 0.0
    %1423 = vmatprep.subr.mxu0 0.0
    %1424 = vmatpush1.xpose.msra.mxu0 0.0
    %1425 = vmatprep.subr.mxu0 0.0
    %1426 = vmatpush1.xpose.msra.mxu0 0.0
    %1427 = vmatprep.subr.mxu0 0.0
    %1428 = vmatpush1.xpose.msra.mxu0 0.0
    %1429 = vmatprep.subr.mxu0 0.0
    %1430 = vmatpush1.xpose.msra.mxu0 0.0
    %1431 = vmatprep.subr.mxu0 0.0
    %1432 = vmatpush1.xpose.msra.mxu0 0.0
    %1433 = vmatprep.subr.mxu0 0.0
    %1434 = vmatpush1.xpose.msra.mxu0 0.0
    %1435 = vmatprep.subr.mxu0 0.0
    %1436 = vmatpush1.xpose.msra.mxu0 0.0
    %1437 = vmatprep.subr.mxu0 0.0
    %1438 = vmatpush1.xpose.msra.mxu0 %v1405
    %1439 = vmatprep.subr.mxu0 0.0
    %1440 = vmatpush2.xpose.msra.mxu0 0.0
    %1441 = vmatprep.subr.mxu0 0.0
    %1442 = vmatpush2.xpose.msra.mxu0 0.0
    %1443 = vmatprep.subr.mxu0 0.0
    %1444 = vmatpush2.xpose.msra.mxu0 0.0
    %1445 = vmatprep.subr.mxu0 0.0
    %1446 = vmatpush2.xpose.msra.mxu0 0.0
    %1447 = vmatprep.subr.mxu0 0.0
    %1448 = vmatpush2.xpose.msra.mxu0 0.0
    %1449 = vmatprep.subr.mxu0 0.0
    %1450 = vmatpush2.xpose.msra.mxu0 0.0
    %1451 = vmatprep.subr.mxu0 0.0
    %1452 = vmatpush2.xpose.msra.mxu0 0.0
    %1453 = vmatprep.subr.mxu0 0.0
    %1454 = vmatpush2.xpose.msra.mxu0 0.0
    %1455 = vmatprep.subr.mxu0 0.0
    %1456 = vmatpush2.xpose.msra.mxu0 0.0
    %1457 = vmatprep.subr.mxu0 0.0
    %1458 = vmatpush2.xpose.msra.mxu0 0.0
    %1459 = vmatprep.subr.mxu0 0.0
    %1460 = vmatpush2.xpose.msra.mxu0 0.0
    %1461 = vmatprep.subr.mxu0 0.0
    %1462 = vmatpush2.xpose.msra.mxu0 0.0
    %1463 = vmatprep.subr.mxu0 0.0
    %1464 = vmatpush2.xpose.msra.mxu0 0.0
    %1465 = vmatprep.subr.mxu0 0.0
    %1466 = vmatpush2.xpose.msra.mxu0 0.0
    %1467 = vmatprep.subr.mxu0 0.0
    %1468 = vmatpush2.xpose.msra.mxu0 0.0
    %1469 = vmatprep.subr.mxu0 0.0
    %1470 = vmatpush2.xpose.msra.mxu0 0.0
    %1471 = vmatprep.mubr.f32.mxu0 0.0
    %1472 = vmatmul.mubr.f32.gmra.mxu0 %v1403
    %v1473 = vpop.f32.mrf.mxu0
    %v1474 = vadd.f32 0.0, %v1473
    %v1475 = vpop.f32.mrf.mxu0
    %1476 = vdwg.mxu0
    %v1477 = vsel %vm338, %v1396, -inf
    %1478 = vmax.xlane.f32.xlu0 %v1477
    %v1479 = vpop.xlane.xlu0 %1478
    %v1480 = vsel %vm338, %v1474, -inf
    %1481 = vmax.xlane.f32.xlu0 %v1480
    %v1482 = vpop.xlane.xlu0 %1481
    %v1483 = vsub.f32 %v1396, %v1479
    %v1484 = vsub.f32 %v1474, %v1482
    %v1485 = vmul.f32 %v1483, 1.442695
    %v1486 = vpow.pop %v1485
    %v1487 = vmul.f32 %v1484, 1.442695
    %v1488 = vpow.pop %v1487
    %v1489 = vsel %vm338, %v1486, 0.0
    %1490 = vadd.xlane.f32.xlu0 %v1489
    %v1491 = vpop.xlane.xlu0 %1490
    %v1492 = vsel %vm338, %v1488, 0.0
    %1493 = vadd.xlane.f32.xlu0 %v1492
    %v1494 = vpop.xlane.xlu0 %1493
    %v1495 = vrcp.pop %v1491
    %v1496 = vrcp.pop %v1494
    %v1497 = vmul.f32 %v1486, %v1495
    %v1498 = vmul.f32 %v1488, %v1496
    %1499 = vrot.lane.b32.xlu0 %v330, 104
    %v1500 = vpop.permute.xlu0 %1499
    %v1503 = vsel %vm338, %v1497, 0
    %1505 = vmatprep.subr.mxu0 0.0
    %1506 = vmatpush1.msra.mxu0 0.0
    %1507 = vmatprep.subr.mxu0 0.0
    %1508 = vmatpush1.msra.mxu0 0.0
    %1509 = vmatprep.subr.mxu0 0.0
    %1510 = vmatpush1.msra.mxu0 0.0
    %1511 = vmatprep.subr.mxu0 0.0
    %1512 = vmatpush1.msra.mxu0 0.0
    %1513 = vmatprep.subr.mxu0 0.0
    %1514 = vmatpush1.msra.mxu0 0.0
    %1515 = vmatprep.subr.mxu0 0.0
    %1516 = vmatpush1.msra.mxu0 0.0
    %1517 = vmatprep.subr.mxu0 0.0
    %1518 = vmatpush1.msra.mxu0 0.0
    %1519 = vmatprep.subr.mxu0 0.0
    %1520 = vmatpush1.msra.mxu0 0.0
    %1521 = vmatprep.subr.mxu0 0.0
    %1522 = vmatpush1.msra.mxu0 0.0
    %1523 = vmatprep.subr.mxu0 0.0
    %1524 = vmatpush1.msra.mxu0 0.0
    %1525 = vmatprep.subr.mxu0 0.0
    %1526 = vmatpush1.msra.mxu0 0.0
    %1527 = vmatprep.subr.mxu0 0.0
    %1528 = vmatpush1.msra.mxu0 0.0
    %1529 = vmatprep.subr.mxu0 0.0
    %1530 = vmatpush1.msra.mxu0 0.0
    %1531 = vmatprep.subr.mxu0 0.0
    %1532 = vmatpush1.msra.mxu0 0.0
    %1533 = vmatprep.subr.mxu0 0.0
    %1534 = vmatpush1.msra.mxu0 0.0
    %1535 = vmatprep.subr.mxu0 0.0
    %1536 = vmatpush1.msra.mxu0 %v1500
    %1537 = vmatprep.subr.mxu0 0.0
    %1538 = vmatpush2.msra.mxu0 0.0
    %1539 = vmatprep.subr.mxu0 0.0
    %1540 = vmatpush2.msra.mxu0 0.0
    %1541 = vmatprep.subr.mxu0 0.0
    %1542 = vmatpush2.msra.mxu0 0.0
    %1543 = vmatprep.subr.mxu0 0.0
    %1544 = vmatpush2.msra.mxu0 0.0
    %1545 = vmatprep.subr.mxu0 0.0
    %1546 = vmatpush2.msra.mxu0 0.0
    %1547 = vmatprep.subr.mxu0 0.0
    %1548 = vmatpush2.msra.mxu0 0.0
    %1549 = vmatprep.subr.mxu0 0.0
    %1550 = vmatpush2.msra.mxu0 0.0
    %1551 = vmatprep.subr.mxu0 0.0
    %1552 = vmatpush2.msra.mxu0 0.0
    %1553 = vmatprep.subr.mxu0 0.0
    %1554 = vmatpush2.msra.mxu0 0.0
    %1555 = vmatprep.subr.mxu0 0.0
    %1556 = vmatpush2.msra.mxu0 0.0
    %1557 = vmatprep.subr.mxu0 0.0
    %1558 = vmatpush2.msra.mxu0 0.0
    %1559 = vmatprep.subr.mxu0 0.0
    %1560 = vmatpush2.msra.mxu0 0.0
    %1561 = vmatprep.subr.mxu0 0.0
    %1562 = vmatpush2.msra.mxu0 0.0
    %1563 = vmatprep.subr.mxu0 0.0
    %1564 = vmatpush2.msra.mxu0 0.0
    %1565 = vmatprep.subr.mxu0 0.0
    %1566 = vmatpush2.msra.mxu0 0.0
    %1567 = vmatprep.subr.mxu0 0.0
    %1568 = vmatpush2.msra.mxu0 0.0
    %1569 = vmatprep.mubr.f32.mxu0 0.0
    %1570 = vmatmul.mubr.f32.gmra.mxu0 %v1503
    %v1571 = vpop.f32.mrf.mxu0
    %v1572 = vadd.f32 0.0, %v1571
    %v1573 = vpop.f32.mrf.mxu0
    %1574 = vdwg.mxu0
    %1575 = vrot.lane.b32.xlu0 %v335, 104
    %v1576 = vpop.permute.xlu0 %1575
    %v1579 = vsel %vm338, %v1498, 0
    %1581 = vmatprep.subr.mxu0 0.0
    %1582 = vmatpush1.msra.mxu0 0.0
    %1583 = vmatprep.subr.mxu0 0.0
    %1584 = vmatpush1.msra.mxu0 0.0
    %1585 = vmatprep.subr.mxu0 0.0
    %1586 = vmatpush1.msra.mxu0 0.0
    %1587 = vmatprep.subr.mxu0 0.0
    %1588 = vmatpush1.msra.mxu0 0.0
    %1589 = vmatprep.subr.mxu0 0.0
    %1590 = vmatpush1.msra.mxu0 0.0
    %1591 = vmatprep.subr.mxu0 0.0
    %1592 = vmatpush1.msra.mxu0 0.0
    %1593 = vmatprep.subr.mxu0 0.0
    %1594 = vmatpush1.msra.mxu0 0.0
    %1595 = vmatprep.subr.mxu0 0.0
    %1596 = vmatpush1.msra.mxu0 0.0
    %1597 = vmatprep.subr.mxu0 0.0
    %1598 = vmatpush1.msra.mxu0 0.0
    %1599 = vmatprep.subr.mxu0 0.0
    %1600 = vmatpush1.msra.mxu0 0.0
    %1601 = vmatprep.subr.mxu0 0.0
    %1602 = vmatpush1.msra.mxu0 0.0
    %1603 = vmatprep.subr.mxu0 0.0
    %1604 = vmatpush1.msra.mxu0 0.0
    %1605 = vmatprep.subr.mxu0 0.0
    %1606 = vmatpush1.msra.mxu0 0.0
    %1607 = vmatprep.subr.mxu0 0.0
    %1608 = vmatpush1.msra.mxu0 0.0
    %1609 = vmatprep.subr.mxu0 0.0
    %1610 = vmatpush1.msra.mxu0 0.0
    %1611 = vmatprep.subr.mxu0 0.0
    %1612 = vmatpush1.msra.mxu0 %v1576
    %1613 = vmatprep.subr.mxu0 0.0
    %1614 = vmatpush2.msra.mxu0 0.0
    %1615 = vmatprep.subr.mxu0 0.0
    %1616 = vmatpush2.msra.mxu0 0.0
    %1617 = vmatprep.subr.mxu0 0.0
    %1618 = vmatpush2.msra.mxu0 0.0
    %1619 = vmatprep.subr.mxu0 0.0
    %1620 = vmatpush2.msra.mxu0 0.0
    %1621 = vmatprep.subr.mxu0 0.0
    %1622 = vmatpush2.msra.mxu0 0.0
    %1623 = vmatprep.subr.mxu0 0.0
    %1624 = vmatpush2.msra.mxu0 0.0
    %1625 = vmatprep.subr.mxu0 0.0
    %1626 = vmatpush2.msra.mxu0 0.0
    %1627 = vmatprep.subr.mxu0 0.0
    %1628 = vmatpush2.msra.mxu0 0.0
    %1629 = vmatprep.subr.mxu0 0.0
    %1630 = vmatpush2.msra.mxu0 0.0
    %1631 = vmatprep.subr.mxu0 0.0
    %1632 = vmatpush2.msra.mxu0 0.0
    %1633 = vmatprep.subr.mxu0 0.0
    %1634 = vmatpush2.msra.mxu0 0.0
    %1635 = vmatprep.subr.mxu0 0.0
    %1636 = vmatpush2.msra.mxu0 0.0
    %1637 = vmatprep.subr.mxu0 0.0
    %1638 = vmatpush2.msra.mxu0 0.0
    %1639 = vmatprep.subr.mxu0 0.0
    %1640 = vmatpush2.msra.mxu0 0.0
    %1641 = vmatprep.subr.mxu0 0.0
    %1642 = vmatpush2.msra.mxu0 0.0
    %1643 = vmatprep.subr.mxu0 0.0
    %1644 = vmatpush2.msra.mxu0 0.0
    %1645 = vmatprep.mubr.f32.mxu0 0.0
    %1646 = vmatmul.mubr.f32.gmra.mxu0 %v1579
    %v1647 = vpop.f32.mrf.mxu0
    %v1648 = vadd.f32 0.0, %v1647
    %v1649 = vpop.f32.mrf.mxu0
    %1650 = vdwg.mxu0
    %1653 = vrot.lane.b32.xlu0 %v911, 8
    %v1654 = vpop.permute.xlu0 %1653
    %1655 = vrot.lane.b32.xlu0 %v988, 8
    %v1656 = vpop.permute.xlu0 %1655
    %1661 = vrot.lane.b32.xlu0 %v1242, 16
    %v1662 = vpop.permute.xlu0 %1661
    %1663 = vrot.lane.b32.xlu0 %v1318, 16
    %v1664 = vpop.permute.xlu0 %1663
    %1669 = vrot.lane.b32.xlu0 %v1572, 24
    %v1670 = vpop.permute.xlu0 %1669
    %1671 = vrot.lane.b32.xlu0 %v1648, 24
    %v1672 = vpop.permute.xlu0 %1671
    %v1675 = vsel %vm338, %v583, %v1654
    %v1676 = vsel %vm338, %v656, %v1656
    %vm1677 = vcmask 130048
    %v1678 = vsel %vm1677, %v1675, %v1662
    %v1679 = vsel %vm1677, %v1676, %v1664
    %vm1680 = vcmask 195584
    %v1681 = vsel %vm1680, %v1678, %v1670
    %v1682 = vsel %vm1680, %v1679, %v1672
    %v1683 = vld [vmem:[#allocation10] sm:$0xff]
    %v1684 = vld [vmem:[#allocation10 + $0x8] sm:$0xff]
    %v1685 = vld [vmem:[#allocation10 + $0x10] sm:$0xff]
    %v1686 = vld [vmem:[#allocation10 + $0x18] sm:$0xff]
    %v1687 = vld [vmem:[%s5] sm:$0x1]
    %v1689 = vlaneseq
    %v1690 = vshrl.u32 %v1689, 7
    %v1691 = vsub.s32 0, %v1690
    %v1692 = vrot.slane %v1687, %v1691
    %v1695 = vsel %vm98, %v1681, 0
    %v1698 = vsel %vm98, %v1682, 0
    %1700 = vmatprep.subr.mxu0 0.0
    %1701 = vmatpush1.msra.mxu0 0.0
    %1702 = vmatprep.subr.mxu0 0.0
    %1703 = vmatpush1.msra.mxu0 0.0
    %1704 = vmatprep.subr.mxu0 0.0
    %1705 = vmatpush1.msra.mxu0 0.0
    %1706 = vmatprep.subr.mxu0 0.0
    %1707 = vmatpush1.msra.mxu0 0.0
    %1708 = vmatprep.subr.mxu0 0.0
    %1709 = vmatpush1.msra.mxu0 0.0
    %1710 = vmatprep.subr.mxu0 0.0
    %1711 = vmatpush1.msra.mxu0 0.0
    %1712 = vmatprep.subr.mxu0 0.0
    %1713 = vmatpush1.msra.mxu0 0.0
    %1714 = vmatprep.subr.mxu0 0.0
    %1715 = vmatpush1.msra.mxu0 0.0
    %1716 = vmatprep.subr.mxu0 0.0
    %1717 = vmatpush1.msra.mxu0 0.0
    %1718 = vmatprep.subr.mxu0 0.0
    %1719 = vmatpush1.msra.mxu0 0.0
    %1720 = vmatprep.subr.mxu0 0.0
    %1721 = vmatpush1.msra.mxu0 0.0
    %1722 = vmatprep.subr.mxu0 0.0
    %1723 = vmatpush1.msra.mxu0 0.0
    %1724 = vmatprep.subr.mxu0 0.0
    %1725 = vmatpush1.msra.mxu0 %v1686
    %1726 = vmatprep.subr.mxu0 0.0
    %1727 = vmatpush1.msra.mxu0 %v1685
    %1728 = vmatprep.subr.mxu0 0.0
    %1729 = vmatpush1.msra.mxu0 %v1684
    %1730 = vmatprep.subr.mxu0 0.0
    %1731 = vmatpush1.msra.mxu0 %v1683
    %1732 = vmatprep.subr.mxu0 0.0
    %1733 = vmatpush2.msra.mxu0 0.0
    %1734 = vmatprep.subr.mxu0 0.0
    %1735 = vmatpush2.msra.mxu0 0.0
    %1736 = vmatprep.subr.mxu0 0.0
    %1737 = vmatpush2.msra.mxu0 0.0
    %1738 = vmatprep.subr.mxu0 0.0
    %1739 = vmatpush2.msra.mxu0 0.0
    %1740 = vmatprep.subr.mxu0 0.0
    %1741 = vmatpush2.msra.mxu0 0.0
    %1742 = vmatprep.subr.mxu0 0.0
    %1743 = vmatpush2.msra.mxu0 0.0
    %1744 = vmatprep.subr.mxu0 0.0
    %1745 = vmatpush2.msra.mxu0 0.0
    %1746 = vmatprep.subr.mxu0 0.0
    %1747 = vmatpush2.msra.mxu0 0.0
    %1748 = vmatprep.subr.mxu0 0.0
    %1749 = vmatpush2.msra.mxu0 0.0
    %1750 = vmatprep.subr.mxu0 0.0
    %1751 = vmatpush2.msra.mxu0 0.0
    %1752 = vmatprep.subr.mxu0 0.0
    %1753 = vmatpush2.msra.mxu0 0.0
    %1754 = vmatprep.subr.mxu0 0.0
    %1755 = vmatpush2.msra.mxu0 0.0
    %1756 = vmatprep.subr.mxu0 0.0
    %1757 = vmatpush2.msra.mxu0 0.0
    %1758 = vmatprep.subr.mxu0 0.0
    %1759 = vmatpush2.msra.mxu0 0.0
    %1760 = vmatprep.subr.mxu0 0.0
    %1761 = vmatpush2.msra.mxu0 0.0
    %1762 = vmatprep.subr.mxu0 0.0
    %1763 = vmatpush2.msra.mxu0 0.0
    %1764 = vmatprep.mubr.f32.mxu0 0.0
    %1765 = vmatmul.mubr.f32.gmra.mxu0 %v1695
    %v1766 = vpop.f32.mrf.mxu0
    %v1767 = vadd.f32 %v1692, %v1766
    %v1768 = vpop.f32.mrf.mxu0
    %1769 = vmatprep.mubr.f32.mxu0 0.0
    %1770 = vmatmul.mubr.f32.gmra.mxu0 %v1698
    %v1771 = vpop.f32.mrf.mxu0
    %v1772 = vadd.f32 %v1692, %v1771
    %v1773 = vpop.f32.mrf.mxu0
    %1774 = vdwg.mxu0
    %1775 = vst [vmem:[#allocation11] sm:$0xff] %v1767
    %1776 = vst [vmem:[#allocation11 + $0x8] sm:$0xff] %v1772
    // Predicated region
    $region46: #{tpu_custom_call.1} parent=1 // pred_check
      _
    $region47: #{tpu_custom_call.1} parent=1 // pred_check_branch
      %1778 = sbr.rel (0) target = $region49
    $region48: #{tpu_custom_call.1} parent=1 // pred_region
      %s1780 = ssub.s32 256, 256
      %1781 = vsyncadd [#allocation4], %s1780
      %s1782 = sshll.u32 [#allocation11], 4
      %s1783 = int_to_ptr.vmem [resolvable:$true] %s1782
      %1788 = dma.vmem_to_hbm [thread:$0]  %s1783, 256, %s6, [#allocation4], 128, 128, 8
    $region49: #{tpu_custom_call.1} parent=1 // pred_fallthru
      _
    // Predicated region
    $region50: #{tpu_custom_call.1} parent=1 // pred_check
      _
    $region51: #{tpu_custom_call.1} parent=1 // pred_check_branch
      %1790 = sbr.rel (0) target = $region53
    $region52: #{tpu_custom_call.1} parent=1 // pred_region
      %1791 = dma.done [#allocation4], 256
    $region53: #{tpu_custom_call.1} parent=1 // pred_fallthru
      _
    %1792 = vsyncpa [#allocation3], 1
    %1793 = vsyncpa [#allocation6], 1
    %1794 = vsyncpa [#allocation9], 1
    %1795 = vsyncpa [#allocation4], 1

</llo_original>
